<compile_context>
chip_gen: v5e
topology: v5e:2x2
jax: 0.10.0
libtpu: 0.0.40
codegen_flags: <defaults>
</compile_context>

<pallas_src>
import functools

import jax
import jax.numpy as jnp
from jax.experimental import pallas as pl
from jax.experimental.pallas import tpu as pltpu


# ------------------------------ small helpers --------------------------------
def _round_up(x, m):
    return (x + m - 1) // m * m


def _pick_time_block(S):
    for t in (32, 16, 8):
        if S % t == 0:
            return t
    return S  # short / odd sequence: one block covering the whole sequence


def _pick_batch_block(B):
    if B > 8 and B % 8 == 0:
        return 8  # gives >=2 batch blocks -> "parallel" axis feeds both TCs on v7x
    return B


def _sigmoid(x):
    # One EUP transcendental per gate: sigmoid(x) = 0.5 * (tanh(x/2) + 1).
    return 0.5 * (jnp.tanh(0.5 * x) + 1.0)


# ------------------------ tiled matmul + bias kernel --------------------------
# Used both for the hoisted LSTM input projection and for the final Linear.
def _matmul_bias_kernel(x_ref, w_ref, b_ref, o_ref):
    o_ref[...] = (jnp.dot(x_ref[...], w_ref[...],
                          preferred_element_type=jnp.float32)
                  + b_ref[...]).astype(o_ref.dtype)


def matmul_bias(x, w, b, *, tm_max=256, tn_max=512):
    """(M,K) @ (K,N) + b(1,N) -> (M,N) f32, tiled on the MXU.

    Output tiles are lane-dense (tn multiple of 128); both grid axes are
    'parallel' so megacore / 2-TC chips shard the work.
    """
    M, K = x.shape
    N = w.shape[1]
    tm = min(tm_max, _round_up(M, 8))
    tn = min(tn_max, _round_up(N, 128))
    Mp, Np = _round_up(M, tm), _round_up(N, tn)
    if Mp != M:
        x = jnp.pad(x, ((0, Mp - M), (0, 0)))
    if Np != N:
        w = jnp.pad(w, ((0, 0), (0, Np - N)))
        b = jnp.pad(b, ((0, 0), (0, Np - N)))

    out = pl.pallas_call(
        _matmul_bias_kernel,
        grid=(Mp // tm, Np // tn),
        in_specs=[
            pl.BlockSpec((tm, K), lambda i, j: (i, 0)),
            pl.BlockSpec((K, tn), lambda i, j: (0, j)),
            pl.BlockSpec((1, tn), lambda i, j: (0, j)),
        ],
        out_specs=pl.BlockSpec((tm, tn), lambda i, j: (i, j)),
        out_shape=jax.ShapeDtypeStruct((Mp, Np), jnp.float32),
        compiler_params=pltpu.CompilerParams(
            dimension_semantics=("parallel", "parallel"),
            vmem_limit_bytes=48 * 1024 * 1024),
    )(x, w, b)

    if Mp != M or Np != N:
        out = out[:M, :N]
    return out


# --------------------------- LSTM recurrence kernel ---------------------------
def _lstm_rec_kernel(xw_ref, whh_ref, y_ref, hn_ref, cn_ref, h_sc, c_sc,
                     *, t_blk, batch_major_out):
    t_idx = pl.program_id(1)                      # time axis (sequential)

    @pl.when(t_idx == 0)
    def _():
        # zero initial state (PyTorch _init_state) -- no h0/c0 DMA needed
        h_sc[...] = jnp.zeros_like(h_sc)
        c_sc[...] = jnp.zeros_like(c_sc)

    H = h_sc.shape[-1]
    h = h_sc[...]
    c = c_sc[...]

    # Static Python loop == fully unrolled: all Ref indices are compile-time
    # constants and h/c are carried in vregs across the time block.
    for tt in range(t_blk):
        gates = xw_ref[tt] + jnp.dot(h.astype(whh_ref.dtype), whh_ref[...],
                                     preferred_element_type=jnp.float32)
        i = _sigmoid(gates[:, 0 * H:1 * H])
        f = _sigmoid(gates[:, 1 * H:2 * H])
        g = jnp.tanh(gates[:, 2 * H:3 * H])
        o = _sigmoid(gates[:, 3 * H:4 * H])
        c = f * c + i * g
        h = o * jnp.tanh(c)
        if batch_major_out:
            y_ref[:, tt, :] = h          # (B, S, H) output layout
        else:
            y_ref[tt] = h                # (S, B, H) output layout

    h_sc[...] = h
    c_sc[...] = c

    @pl.when(t_idx == pl.num_programs(1) - 1)
    def _():
        hn_ref[...] = h
        cn_ref[...] = c


def lstm_layer(x_tm, w_ih_t, w_hh_t, bias, *, batch_major_out=False):
    """One LSTM layer.

    x_tm: (S, B, Ein) time-major activations (f32).
    Returns (y, h_n, c_n); y is (B, S, H) if batch_major_out else (S, B, H).
    """
    S, B, Ein = x_tm.shape
    H = w_hh_t.shape[0]

    # Hoisted input projection (+ fused bias): one big MXU matmul over all
    # S*B rows instead of S tiny per-step matmuls.
    xw = matmul_bias(x_tm.reshape(S * B, Ein).astype(w_ih_t.dtype), w_ih_t, bias)
    xw = xw.reshape(S, B, 4 * H)                  # f32

    t_blk = _pick_time_block(S)
    b_blk = _pick_batch_block(B)
    # Batch-major output needs a (t_blk, H) tail that satisfies the (8,128)
    # rule; otherwise fall back to time-major + a wrapper transpose.
    bm = batch_major_out and (t_blk % 8 == 0 or t_blk == S)

    if bm:
        y_shape = (B, S, H)
        y_spec = pl.BlockSpec((b_blk, t_blk, H), lambda b, t: (b, t, 0))
    else:
        y_shape = (S, B, H)
        y_spec = pl.BlockSpec((t_blk, b_blk, H), lambda b, t: (t, b, 0))

    kernel = functools.partial(_lstm_rec_kernel, t_blk=t_blk,
                               batch_major_out=bm)

    y, h_n, c_n = pl.pallas_call(
        kernel,
        grid=(B // b_blk, S // t_blk),            # (parallel batch, seq. time)
        in_specs=[
            pl.BlockSpec((t_blk, b_blk, 4 * H), lambda b, t: (t, b, 0)),  # XW
            pl.BlockSpec((H, 4 * H), lambda b, t: (0, 0)),                # W_hh^T
        ],
        out_specs=(
            y_spec,
            pl.BlockSpec((b_blk, H), lambda b, t: (b, 0)),                # h_n
            pl.BlockSpec((b_blk, H), lambda b, t: (b, 0)),                # c_n
        ),
        out_shape=(
            jax.ShapeDtypeStruct(y_shape, jnp.float32),
            jax.ShapeDtypeStruct((B, H), jnp.float32),
            jax.ShapeDtypeStruct((B, H), jnp.float32),
        ),
        scratch_shapes=[pltpu.VMEM((b_blk, H), jnp.float32),
                        pltpu.VMEM((b_blk, H), jnp.float32)],
        compiler_params=pltpu.CompilerParams(
            dimension_semantics=("parallel", "arbitrary"),
            vmem_limit_bytes=48 * 1024 * 1024),
    )(xw, w_hh_t)

    if batch_major_out and not bm:
        y = jnp.transpose(y, (1, 0, 2))
    return y, h_n, c_n


# ------------------------------- parameters -----------------------------------
def init_params(key, vocab_size, embedding_dim, hidden_dim, num_layers):
    ks = jax.random.split(key, 3 + num_layers)
    bound = 1.0 / (hidden_dim ** 0.5)
    params = {
        "embedding": jax.random.normal(ks[0], (vocab_size, embedding_dim),
                                       jnp.float32),
        "layers": [],
        # fc stored pre-transposed (H, V) bf16; bias (1, V) f32
        "fc_w_t": jax.random.uniform(ks[1], (hidden_dim, vocab_size),
                                     jnp.float32, -bound, bound
                                     ).astype(jnp.bfloat16),
        "fc_b": jax.random.uniform(ks[2], (1, vocab_size), jnp.float32,
                                   -bound, bound),
    }
    for l in range(num_layers):
        in_dim = embedding_dim if l == 0 else hidden_dim
        k0, k1, k2, k3 = jax.random.split(ks[3 + l], 4)
        params["layers"].append({
            # pre-transposed (in_dim, 4H) / (H, 4H), bf16; gate order i,f,g,o
            "w_ih_t": jax.random.uniform(k0, (in_dim, 4 * hidden_dim),
                                         jnp.float32, -bound, bound
                                         ).astype(jnp.bfloat16),
            "w_hh_t": jax.random.uniform(k1, (hidden_dim, 4 * hidden_dim),
                                         jnp.float32, -bound, bound
                                         ).astype(jnp.bfloat16),
            # b_ih + b_hh, kept f32 (fused into the input projection)
            "b": (jax.random.uniform(k2, (1, 4 * hidden_dim), jnp.float32,
                                     -bound, bound)
                  + jax.random.uniform(k3, (1, 4 * hidden_dim), jnp.float32,
                                       -bound, bound)),
        })
    return params


# ------------------------------- full forward ---------------------------------
@jax.jit
def rnn_forward(params, x_tokens):
    """x_tokens: (B, S) int32. Returns (logits (B*S, V), (h_n, c_n))."""
    B, S = x_tokens.shape
    num_layers = len(params["layers"])
    H = params["layers"][0]["w_hh_t"].shape[0]

    # Embedding gathered directly into time-major (S, B, E): no HBM transpose
    # of the activation tensor.  (Gather stays in JAX glue.)
    emb_tm = jnp.take(params["embedding"], x_tokens.T, axis=0)

    layer_in = emb_tm
    h_ns, c_ns = [], []
    for l, p in enumerate(params["layers"]):
        last = l == num_layers - 1
        y, h_n, c_n = lstm_layer(layer_in, p["w_ih_t"], p["w_hh_t"], p["b"],
                                 batch_major_out=last)
        h_ns.append(h_n)
        c_ns.append(c_n)
        layer_in = y

    # Last layer already emitted (B, S, H); flatten matches PyTorch's
    # batch-first reshape(B*S, H) with no extra transpose.
    flat = layer_in.reshape(B * S, H).astype(params["fc_w_t"].dtype)
    logits = matmul_bias(flat, params["fc_w_t"], params["fc_b"])

    return logits, (jnp.stack(h_ns, axis=0), jnp.stack(c_ns, axis=0))


# ------------------------- pure-JAX reference (check) --------------------------
def rnn_reference(params, x_tokens):
    B, S = x_tokens.shape
    H = params["layers"][0]["w_hh_t"].shape[0]
    emb_tm = jnp.take(params["embedding"], x_tokens.T, axis=0)   # (S, B, E)

    def layer(x_tm, p):
        E_in = x_tm.shape[-1]
        xw = (jnp.dot(x_tm.reshape(S * B, E_in).astype(jnp.bfloat16),
                      p["w_ih_t"], preferred_element_type=jnp.float32)
              + p["b"]).reshape(S, B, 4 * H)

        def step(carry, xw_t):
            h, c = carry
            gates = xw_t + jnp.dot(h.astype(jnp.bfloat16), p["w_hh_t"],
                                   preferred_element_type=jnp.float32)
            i = _sigmoid(gates[:, 0 * H:1 * H])
            f = _sigmoid(gates[:, 1 * H:2 * H])
            g = jnp.tanh(gates[:, 2 * H:3 * H])
            o = _sigmoid(gates[:, 3 * H:4 * H])
            c = f * c + i * g
            h = o * jnp.tanh(c)
            return (h, c), h

        init = (jnp.zeros((B, H), jnp.float32), jnp.zeros((B, H), jnp.float32))
        (h_n, c_n), ys = jax.lax.scan(step, init, xw)
        return ys, h_n, c_n

    layer_in = emb_tm
    h_ns, c_ns = [], []
    for p in params["layers"]:
        layer_in, h_n, c_n = layer(layer_in, p)
        h_ns.append(h_n)
        c_ns.append(c_n)

    flat = jnp.transpose(layer_in, (1, 0, 2)).reshape(B * S, H)
    logits = (jnp.dot(flat.astype(jnp.bfloat16), params["fc_w_t"],
                      preferred_element_type=jnp.float32) + params["fc_b"])
    return logits, (jnp.stack(h_ns), jnp.stack(c_ns))


if __name__ == "__main__":
    vocab_size, embedding_dim, hidden_dim, num_layers = 50, 16, 32, 2
    B, S = 2, 8

    key = jax.random.PRNGKey(0)
    pkey, xkey = jax.random.split(key)
    params = init_params(pkey, vocab_size, embedding_dim, hidden_dim, num_layers)
    x_tokens = jax.random.randint(xkey, (B, S), 0, vocab_size, dtype=jnp.int32)

    logits, (h_n, c_n) = rnn_forward(params, x_tokens)
    jax.block_until_ready((logits, h_n, c_n))

    ref_logits, (ref_h, ref_c) = rnn_reference(params, x_tokens)
    assert logits.shape == (B * S, vocab_size)
    assert h_n.shape == (num_layers, B, hidden_dim)
    assert c_n.shape == (num_layers, B, hidden_dim)
    assert jnp.allclose(logits, ref_logits, atol=2e-2, rtol=2e-2)
    assert jnp.allclose(h_n, ref_h, atol=2e-2, rtol=2e-2)
    assert jnp.allclose(c_n, ref_c, atol=2e-2, rtol=2e-2)

    print("KERNEL_OK")
</pallas_src>

<mosaic_0001>
module attributes {stable_mosaic.version = 11 : i64} {
  func.func @_matmul_bias_kernel(%arg0: i32, %arg1: i32, %arg2: memref<16x16xbf16, #tpu.memory_space<vmem>>, %arg3: memref<16x128xbf16, #tpu.memory_space<vmem>>, %arg4: memref<1x128xf32, #tpu.memory_space<vmem>>, %arg5: memref<16x128xf32, #tpu.memory_space<vmem>>) attributes {dimension_semantics = [#tpu.dimension_semantics<parallel>, #tpu.dimension_semantics<parallel>], iteration_bounds = array<i64: 1, 1>, scalar_prefetch = 0 : i64, scratch_operands = 0 : i64, tpu.core_type = #tpu.core_type<tc>, window_params = [{transform_indices = @transform_0, window_bounds = array<i64: 16, 16>}, {transform_indices = @transform_1, window_bounds = array<i64: 16, 128>}, {transform_indices = @transform_2, window_bounds = array<i64: 1, 128>}, {transform_indices = @transform_3, window_bounds = array<i64: 16, 128>}]} {
    %c0 = arith.constant 0 : index
    %c0_0 = arith.constant 0 : index
    %0 = vector.load %arg2[%c0, %c0_0] : memref<16x16xbf16, #tpu.memory_space<vmem>>, vector<16x16xbf16>
    %c0_1 = arith.constant 0 : index
    %c0_2 = arith.constant 0 : index
    %1 = vector.load %arg3[%c0_1, %c0_2] : memref<16x128xbf16, #tpu.memory_space<vmem>>, vector<16x128xbf16>
    %cst = arith.constant dense<0.000000e+00> : vector<16x128xf32>
    %2 = tpu.matmul %0, %1, %cst {dimension_numbers = #tpu.dot_dimension_numbers<[1], [0], [0], [1], [0, 0, 1, 1], [], []>} : vector<16x16xbf16>, vector<16x128xbf16>, vector<16x128xf32> -> vector<16x128xf32>
    %c0_3 = arith.constant 0 : index
    %c0_4 = arith.constant 0 : index
    %3 = vector.load %arg4[%c0_3, %c0_4] : memref<1x128xf32, #tpu.memory_space<vmem>>, vector<1x128xf32>
    %4 = vector.broadcast %3 : vector<1x128xf32> to vector<16x128xf32>
    %5 = arith.addf %2, %4 : vector<16x128xf32>
    %c0_5 = arith.constant 0 : index
    %c0_6 = arith.constant 0 : index
    %6 = vector.load %arg5[%c0_5, %c0_6] : memref<16x128xf32, #tpu.memory_space<vmem>>, vector<16x128xf32>
    tpu.vector_store %arg5[%c0_5, %c0_6], %5 {strides = array<i32>} : memref<16x128xf32, #tpu.memory_space<vmem>>, vector<16x128xf32>,
    return
  }
  func.func @transform_0(%arg0: i32, %arg1: i32) -> (i32, i32) {
    %c0_i32 = arith.constant 0 : i32
    %c0_i32_0 = arith.constant 0 : i32
    return %arg0, %c0_i32 : i32, i32
  }
  func.func @transform_1(%arg0: i32, %arg1: i32) -> (i32, i32) {
    %c0_i32 = arith.constant 0 : i32
    %c0_i32_0 = arith.constant 0 : i32
    return %c0_i32, %arg1 : i32, i32
  }
  func.func @transform_2(%arg0: i32, %arg1: i32) -> (i32, i32) {
    %c0_i32 = arith.constant 0 : i32
    %c0_i32_0 = arith.constant 0 : i32
    return %c0_i32, %arg1 : i32, i32
  }
  func.func @transform_3(%arg0: i32, %arg1: i32) -> (i32, i32) {
    %c0_i32 = arith.constant 0 : i32
    return %arg0, %arg1 : i32, i32
  }
}

module attributes {stable_mosaic.version = 11 : i64} {
  func.func @_matmul_bias_kernel(%arg0: i32, %arg1: i32, %arg2: memref<16x32xbf16, #tpu.memory_space<vmem>>, %arg3: memref<32x128xbf16, #tpu.memory_space<vmem>>, %arg4: memref<1x128xf32, #tpu.memory_space<vmem>>, %arg5: memref<16x128xf32, #tpu.memory_space<vmem>>) attributes {dimension_semantics = [#tpu.dimension_semantics<parallel>, #tpu.dimension_semantics<parallel>], iteration_bounds = array<i64: 1, 1>, scalar_prefetch = 0 : i64, scratch_operands = 0 : i64, tpu.core_type = #tpu.core_type<tc>, window_params = [{transform_indices = @transform_0, window_bounds = array<i64: 16, 32>}, {transform_indices = @transform_1, window_bounds = array<i64: 32, 128>}, {transform_indices = @transform_2, window_bounds = array<i64: 1, 128>}, {transform_indices = @transform_3, window_bounds = array<i64: 16, 128>}]} {
    %c0 = arith.constant 0 : index
    %c0_0 = arith.constant 0 : index
    %0 = vector.load %arg2[%c0, %c0_0] : memref<16x32xbf16, #tpu.memory_space<vmem>>, vector<16x32xbf16>
    %c0_1 = arith.constant 0 : index
    %c0_2 = arith.constant 0 : index
    %1 = vector.load %arg3[%c0_1, %c0_2] : memref<32x128xbf16, #tpu.memory_space<vmem>>, vector<32x128xbf16>
    %cst = arith.constant dense<0.000000e+00> : vector<16x128xf32>
    %2 = tpu.matmul %0, %1, %cst {dimension_numbers = #tpu.dot_dimension_numbers<[1], [0], [0], [1], [0, 0, 1, 1], [], []>} : vector<16x32xbf16>, vector<32x128xbf16>, vector<16x128xf32> -> vector<16x128xf32>
    %c0_3 = arith.constant 0 : index
    %c0_4 = arith.constant 0 : index
    %3 = vector.load %arg4[%c0_3, %c0_4] : memref<1x128xf32, #tpu.memory_space<vmem>>, vector<1x128xf32>
    %4 = vector.broadcast %3 : vector<1x128xf32> to vector<16x128xf32>
    %5 = arith.addf %2, %4 : vector<16x128xf32>
    %c0_5 = arith.constant 0 : index
    %c0_6 = arith.constant 0 : index
    %6 = vector.load %arg5[%c0_5, %c0_6] : memref<16x128xf32, #tpu.memory_space<vmem>>, vector<16x128xf32>
    tpu.vector_store %arg5[%c0_5, %c0_6], %5 {strides = array<i32>} : memref<16x128xf32, #tpu.memory_space<vmem>>, vector<16x128xf32>,
    return
  }
  func.func @transform_0(%arg0: i32, %arg1: i32) -> (i32, i32) {
    %c0_i32 = arith.constant 0 : i32
    %c0_i32_0 = arith.constant 0 : i32
    return %arg0, %c0_i32 : i32, i32
  }
  func.func @transform_1(%arg0: i32, %arg1: i32) -> (i32, i32) {
    %c0_i32 = arith.constant 0 : i32
    %c0_i32_0 = arith.constant 0 : i32
    return %c0_i32, %arg1 : i32, i32
  }
  func.func @transform_2(%arg0: i32, %arg1: i32) -> (i32, i32) {
    %c0_i32 = arith.constant 0 : i32
    %c0_i32_0 = arith.constant 0 : i32
    return %c0_i32, %arg1 : i32, i32
  }
  func.func @transform_3(%arg0: i32, %arg1: i32) -> (i32, i32) {
    %c0_i32 = arith.constant 0 : i32
    return %arg0, %arg1 : i32, i32
  }
}

module attributes {stable_mosaic.version = 11 : i64} {
  func.func @_lstm_rec_kernel(%arg0: i32, %arg1: i32, %arg2: memref<8x2x128xf32, #tpu.memory_space<vmem>>, %arg3: memref<32x128xbf16, #tpu.memory_space<vmem>>, %arg4: memref<8x2x32xf32, #tpu.memory_space<vmem>>, %arg5: memref<2x32xf32, #tpu.memory_space<vmem>>, %arg6: memref<2x32xf32, #tpu.memory_space<vmem>>, %arg7: memref<2x32xf32, #tpu.memory_space<vmem>>, %arg8: memref<2x32xf32, #tpu.memory_space<vmem>>) attributes {dimension_semantics = [#tpu.dimension_semantics<parallel>, #tpu.dimension_semantics<arbitrary>], iteration_bounds = array<i64: 1, 1>, scalar_prefetch = 0 : i64, scratch_operands = 2 : i64, tpu.core_type = #tpu.core_type<tc>, window_params = [{transform_indices = @transform_0, window_bounds = array<i64: 8, 2, 128>}, {pipeline_mode = #tpu.pipeline_mode<synchronous>, transform_indices = @transform_1, window_bounds = array<i64: 32, 128>}, {transform_indices = @transform_2, window_bounds = array<i64: 8, 2, 32>}, {transform_indices = @transform_3, window_bounds = array<i64: 2, 32>}, {transform_indices = @transform_4, window_bounds = array<i64: 2, 32>}]} {
    %c0_i32 = arith.constant 0 : i32
    %0 = arith.cmpi eq, %arg1, %c0_i32 : i32
    %1 = arith.extui %0 : i1 to i32
    %c0_i32_0 = arith.constant 0 : i32
    %2 = arith.cmpi ne, %1, %c0_i32_0 : i32
    scf.if %2 {
      %cst_146 = arith.constant 0.000000e+00 : f32
      %330 = vector.broadcast %cst_146 : f32 to vector<2x32xf32>
      %c0_147 = arith.constant 0 : index
      %c0_148 = arith.constant 0 : index
      %331 = vector.load %arg7[%c0_147, %c0_148] : memref<2x32xf32, #tpu.memory_space<vmem>>, vector<2x32xf32>
      tpu.vector_store %arg7[%c0_147, %c0_148], %330 {strides = array<i32>} : memref<2x32xf32, #tpu.memory_space<vmem>>, vector<2x32xf32>,
      %cst_149 = arith.constant 0.000000e+00 : f32
      %332 = vector.broadcast %cst_149 : f32 to vector<2x32xf32>
      %c0_150 = arith.constant 0 : index
      %c0_151 = arith.constant 0 : index
      %333 = vector.load %arg8[%c0_150, %c0_151] : memref<2x32xf32, #tpu.memory_space<vmem>>, vector<2x32xf32>
      tpu.vector_store %arg8[%c0_150, %c0_151], %332 {strides = array<i32>} : memref<2x32xf32, #tpu.memory_space<vmem>>, vector<2x32xf32>,
    } else {
    }
    %c0 = arith.constant 0 : index
    %c0_1 = arith.constant 0 : index
    %3 = vector.load %arg7[%c0, %c0_1] : memref<2x32xf32, #tpu.memory_space<vmem>>, vector<2x32xf32>
    %c0_2 = arith.constant 0 : index
    %c0_3 = arith.constant 0 : index
    %4 = vector.load %arg8[%c0_2, %c0_3] : memref<2x32xf32, #tpu.memory_space<vmem>>, vector<2x32xf32>
    %c0_4 = arith.constant 0 : index
    %c0_5 = arith.constant 0 : index
    %c0_6 = arith.constant 0 : index
    %5 = vector.load %arg2[%c0_4, %c0_5, %c0_6] : memref<8x2x128xf32, #tpu.memory_space<vmem>>, vector<1x2x128xf32>
    %6 = vector.shape_cast %5 : vector<1x2x128xf32> to vector<2x128xf32>
    %7 = arith.truncf %3 : vector<2x32xf32> to vector<2x32xbf16>
    %c0_7 = arith.constant 0 : index
    %c0_8 = arith.constant 0 : index
    %8 = vector.load %arg3[%c0_7, %c0_8] : memref<32x128xbf16, #tpu.memory_space<vmem>>, vector<32x128xbf16>
    %cst = arith.constant dense<0.000000e+00> : vector<2x128xf32>
    %9 = tpu.matmul %7, %8, %cst {dimension_numbers = #tpu.dot_dimension_numbers<[1], [0], [0], [1], [0, 0, 1, 1], [], []>} : vector<2x32xbf16>, vector<32x128xbf16>, vector<2x128xf32> -> vector<2x128xf32>
    %10 = arith.addf %6, %9 : vector<2x128xf32>
    %11 = vector.extract_strided_slice %10 {offsets = [0, 0], sizes = [2, 32], strides = [1, 1]} : vector<2x128xf32> to vector<2x32xf32>
    %cst_9 = arith.constant 5.000000e-01 : f32
    %12 = vector.broadcast %cst_9 : f32 to vector<2x32xf32>
    %13 = arith.mulf %12, %11 : vector<2x32xf32>
    %14 = math.tanh %13 : vector<2x32xf32>
    %cst_10 = arith.constant 1.000000e+00 : f32
    %15 = vector.broadcast %cst_10 : f32 to vector<2x32xf32>
    %16 = arith.addf %14, %15 : vector<2x32xf32>
    %cst_11 = arith.constant 5.000000e-01 : f32
    %17 = vector.broadcast %cst_11 : f32 to vector<2x32xf32>
    %18 = arith.mulf %17, %16 : vector<2x32xf32>
    %19 = vector.extract_strided_slice %10 {offsets = [0, 32], sizes = [2, 32], strides = [1, 1]} : vector<2x128xf32> to vector<2x32xf32>
    %cst_12 = arith.constant 5.000000e-01 : f32
    %20 = vector.broadcast %cst_12 : f32 to vector<2x32xf32>
    %21 = arith.mulf %20, %19 : vector<2x32xf32>
    %22 = math.tanh %21 : vector<2x32xf32>
    %cst_13 = arith.constant 1.000000e+00 : f32
    %23 = vector.broadcast %cst_13 : f32 to vector<2x32xf32>
    %24 = arith.addf %22, %23 : vector<2x32xf32>
    %cst_14 = arith.constant 5.000000e-01 : f32
    %25 = vector.broadcast %cst_14 : f32 to vector<2x32xf32>
    %26 = arith.mulf %25, %24 : vector<2x32xf32>
    %27 = vector.extract_strided_slice %10 {offsets = [0, 64], sizes = [2, 32], strides = [1, 1]} : vector<2x128xf32> to vector<2x32xf32>
    %28 = math.tanh %27 : vector<2x32xf32>
    %29 = vector.extract_strided_slice %10 {offsets = [0, 96], sizes = [2, 32], strides = [1, 1]} : vector<2x128xf32> to vector<2x32xf32>
    %cst_15 = arith.constant 5.000000e-01 : f32
    %30 = vector.broadcast %cst_15 : f32 to vector<2x32xf32>
    %31 = arith.mulf %30, %29 : vector<2x32xf32>
    %32 = math.tanh %31 : vector<2x32xf32>
    %cst_16 = arith.constant 1.000000e+00 : f32
    %33 = vector.broadcast %cst_16 : f32 to vector<2x32xf32>
    %34 = arith.addf %32, %33 : vector<2x32xf32>
    %cst_17 = arith.constant 5.000000e-01 : f32
    %35 = vector.broadcast %cst_17 : f32 to vector<2x32xf32>
    %36 = arith.mulf %35, %34 : vector<2x32xf32>
    %37 = arith.mulf %26, %4 : vector<2x32xf32>
    %38 = arith.mulf %18, %28 : vector<2x32xf32>
    %39 = arith.addf %37, %38 : vector<2x32xf32>
    %40 = math.tanh %39 : vector<2x32xf32>
    %41 = arith.mulf %36, %40 : vector<2x32xf32>
    %c0_18 = arith.constant 0 : index
    %c0_19 = arith.constant 0 : index
    %c0_20 = arith.constant 0 : index
    %42 = vector.load %arg4[%c0_18, %c0_19, %c0_20] : memref<8x2x32xf32, #tpu.memory_space<vmem>>, vector<1x2x32xf32>
    %43 = vector.shape_cast %42 : vector<1x2x32xf32> to vector<2x32xf32>
    %44 = vector.shape_cast %41 : vector<2x32xf32> to vector<1x2x32xf32>
    tpu.vector_store %arg4[%c0_18, %c0_19, %c0_20], %44 {strides = array<i32>} : memref<8x2x32xf32, #tpu.memory_space<vmem>>, vector<1x2x32xf32>,
    %c1 = arith.constant 1 : index
    %c0_21 = arith.constant 0 : index
    %c0_22 = arith.constant 0 : index
    %45 = vector.load %arg2[%c1, %c0_21, %c0_22] : memref<8x2x128xf32, #tpu.memory_space<vmem>>, vector<1x2x128xf32>
    %46 = vector.shape_cast %45 : vector<1x2x128xf32> to vector<2x128xf32>
    %47 = arith.truncf %41 : vector<2x32xf32> to vector<2x32xbf16>
    %c0_23 = arith.constant 0 : index
    %c0_24 = arith.constant 0 : index
    %48 = vector.load %arg3[%c0_23, %c0_24] : memref<32x128xbf16, #tpu.memory_space<vmem>>, vector<32x128xbf16>
    %cst_25 = arith.constant dense<0.000000e+00> : vector<2x128xf32>
    %49 = tpu.matmul %47, %48, %cst_25 {dimension_numbers = #tpu.dot_dimension_numbers<[1], [0], [0], [1], [0, 0, 1, 1], [], []>} : vector<2x32xbf16>, vector<32x128xbf16>, vector<2x128xf32> -> vector<2x128xf32>
    %50 = arith.addf %46, %49 : vector<2x128xf32>
    %51 = vector.extract_strided_slice %50 {offsets = [0, 0], sizes = [2, 32], strides = [1, 1]} : vector<2x128xf32> to vector<2x32xf32>
    %cst_26 = arith.constant 5.000000e-01 : f32
    %52 = vector.broadcast %cst_26 : f32 to vector<2x32xf32>
    %53 = arith.mulf %52, %51 : vector<2x32xf32>
    %54 = math.tanh %53 : vector<2x32xf32>
    %cst_27 = arith.constant 1.000000e+00 : f32
    %55 = vector.broadcast %cst_27 : f32 to vector<2x32xf32>
    %56 = arith.addf %54, %55 : vector<2x32xf32>
    %cst_28 = arith.constant 5.000000e-01 : f32
    %57 = vector.broadcast %cst_28 : f32 to vector<2x32xf32>
    %58 = arith.mulf %57, %56 : vector<2x32xf32>
    %59 = vector.extract_strided_slice %50 {offsets = [0, 32], sizes = [2, 32], strides = [1, 1]} : vector<2x128xf32> to vector<2x32xf32>
    %cst_29 = arith.constant 5.000000e-01 : f32
    %60 = vector.broadcast %cst_29 : f32 to vector<2x32xf32>
    %61 = arith.mulf %60, %59 : vector<2x32xf32>
    %62 = math.tanh %61 : vector<2x32xf32>
    %cst_30 = arith.constant 1.000000e+00 : f32
    %63 = vector.broadcast %cst_30 : f32 to vector<2x32xf32>
    %64 = arith.addf %62, %63 : vector<2x32xf32>
    %cst_31 = arith.constant 5.000000e-01 : f32
    %65 = vector.broadcast %cst_31 : f32 to vector<2x32xf32>
    %66 = arith.mulf %65, %64 : vector<2x32xf32>
    %67 = vector.extract_strided_slice %50 {offsets = [0, 64], sizes = [2, 32], strides = [1, 1]} : vector<2x128xf32> to vector<2x32xf32>
    %68 = math.tanh %67 : vector<2x32xf32>
    %69 = vector.extract_strided_slice %50 {offsets = [0, 96], sizes = [2, 32], strides = [1, 1]} : vector<2x128xf32> to vector<2x32xf32>
    %cst_32 = arith.constant 5.000000e-01 : f32
    %70 = vector.broadcast %cst_32 : f32 to vector<2x32xf32>
    %71 = arith.mulf %70, %69 : vector<2x32xf32>
    %72 = math.tanh %71 : vector<2x32xf32>
    %cst_33 = arith.constant 1.000000e+00 : f32
    %73 = vector.broadcast %cst_33 : f32 to vector<2x32xf32>
    %74 = arith.addf %72, %73 : vector<2x32xf32>
    %cst_34 = arith.constant 5.000000e-01 : f32
    %75 = vector.broadcast %cst_34 : f32 to vector<2x32xf32>
    %76 = arith.mulf %75, %74 : vector<2x32xf32>
    %77 = arith.mulf %66, %39 : vector<2x32xf32>
    %78 = arith.mulf %58, %68 : vector<2x32xf32>
    %79 = arith.addf %77, %78 : vector<2x32xf32>
    %80 = math.tanh %79 : vector<2x32xf32>
    %81 = arith.mulf %76, %80 : vector<2x32xf32>
    %c1_35 = arith.constant 1 : index
    %c0_36 = arith.constant 0 : index
    %c0_37 = arith.constant 0 : index
    %82 = vector.load %arg4[%c1_35, %c0_36, %c0_37] : memref<8x2x32xf32, #tpu.memory_space<vmem>>, vector<1x2x32xf32>
    %83 = vector.shape_cast %82 : vector<1x2x32xf32> to vector<2x32xf32>
    %84 = vector.shape_cast %81 : vector<2x32xf32> to vector<1x2x32xf32>
    tpu.vector_store %arg4[%c1_35, %c0_36, %c0_37], %84 {strides = array<i32>} : memref<8x2x32xf32, #tpu.memory_space<vmem>>, vector<1x2x32xf32>,
    %c2 = arith.constant 2 : index
    %c0_38 = arith.constant 0 : index
    %c0_39 = arith.constant 0 : index
    %85 = vector.load %arg2[%c2, %c0_38, %c0_39] : memref<8x2x128xf32, #tpu.memory_space<vmem>>, vector<1x2x128xf32>
    %86 = vector.shape_cast %85 : vector<1x2x128xf32> to vector<2x128xf32>
    %87 = arith.truncf %81 : vector<2x32xf32> to vector<2x32xbf16>
    %c0_40 = arith.constant 0 : index
    %c0_41 = arith.constant 0 : index
    %88 = vector.load %arg3[%c0_40, %c0_41] : memref<32x128xbf16, #tpu.memory_space<vmem>>, vector<32x128xbf16>
    %cst_42 = arith.constant dense<0.000000e+00> : vector<2x128xf32>
    %89 = tpu.matmul %87, %88, %cst_42 {dimension_numbers = #tpu.dot_dimension_numbers<[1], [0], [0], [1], [0, 0, 1, 1], [], []>} : vector<2x32xbf16>, vector<32x128xbf16>, vector<2x128xf32> -> vector<2x128xf32>
    %90 = arith.addf %86, %89 : vector<2x128xf32>
    %91 = vector.extract_strided_slice %90 {offsets = [0, 0], sizes = [2, 32], strides = [1, 1]} : vector<2x128xf32> to vector<2x32xf32>
    %cst_43 = arith.constant 5.000000e-01 : f32
    %92 = vector.broadcast %cst_43 : f32 to vector<2x32xf32>
    %93 = arith.mulf %92, %91 : vector<2x32xf32>
    %94 = math.tanh %93 : vector<2x32xf32>
    %cst_44 = arith.constant 1.000000e+00 : f32
    %95 = vector.broadcast %cst_44 : f32 to vector<2x32xf32>
    %96 = arith.addf %94, %95 : vector<2x32xf32>
    %cst_45 = arith.constant 5.000000e-01 : f32
    %97 = vector.broadcast %cst_45 : f32 to vector<2x32xf32>
    %98 = arith.mulf %97, %96 : vector<2x32xf32>
    %99 = vector.extract_strided_slice %90 {offsets = [0, 32], sizes = [2, 32], strides = [1, 1]} : vector<2x128xf32> to vector<2x32xf32>
    %cst_46 = arith.constant 5.000000e-01 : f32
    %100 = vector.broadcast %cst_46 : f32 to vector<2x32xf32>
    %101 = arith.mulf %100, %99 : vector<2x32xf32>
    %102 = math.tanh %101 : vector<2x32xf32>
    %cst_47 = arith.constant 1.000000e+00 : f32
    %103 = vector.broadcast %cst_47 : f32 to vector<2x32xf32>
    %104 = arith.addf %102, %103 : vector<2x32xf32>
    %cst_48 = arith.constant 5.000000e-01 : f32
    %105 = vector.broadcast %cst_48 : f32 to vector<2x32xf32>
    %106 = arith.mulf %105, %104 : vector<2x32xf32>
    %107 = vector.extract_strided_slice %90 {offsets = [0, 64], sizes = [2, 32], strides = [1, 1]} : vector<2x128xf32> to vector<2x32xf32>
    %108 = math.tanh %107 : vector<2x32xf32>
    %109 = vector.extract_strided_slice %90 {offsets = [0, 96], sizes = [2, 32], strides = [1, 1]} : vector<2x128xf32> to vector<2x32xf32>
    %cst_49 = arith.constant 5.000000e-01 : f32
    %110 = vector.broadcast %cst_49 : f32 to vector<2x32xf32>
    %111 = arith.mulf %110, %109 : vector<2x32xf32>
    %112 = math.tanh %111 : vector<2x32xf32>
    %cst_50 = arith.constant 1.000000e+00 : f32
    %113 = vector.broadcast %cst_50 : f32 to vector<2x32xf32>
    %114 = arith.addf %112, %113 : vector<2x32xf32>
    %cst_51 = arith.constant 5.000000e-01 : f32
    %115 = vector.broadcast %cst_51 : f32 to vector<2x32xf32>
    %116 = arith.mulf %115, %114 : vector<2x32xf32>
    %117 = arith.mulf %106, %79 : vector<2x32xf32>
    %118 = arith.mulf %98, %108 : vector<2x32xf32>
    %119 = arith.addf %117, %118 : vector<2x32xf32>
    %120 = math.tanh %119 : vector<2x32xf32>
    %121 = arith.mulf %116, %120 : vector<2x32xf32>
    %c2_52 = arith.constant 2 : index
    %c0_53 = arith.constant 0 : index
    %c0_54 = arith.constant 0 : index
    %122 = vector.load %arg4[%c2_52, %c0_53, %c0_54] : memref<8x2x32xf32, #tpu.memory_space<vmem>>, vector<1x2x32xf32>
    %123 = vector.shape_cast %122 : vector<1x2x32xf32> to vector<2x32xf32>
    %124 = vector.shape_cast %121 : vector<2x32xf32> to vector<1x2x32xf32>
    tpu.vector_store %arg4[%c2_52, %c0_53, %c0_54], %124 {strides = array<i32>} : memref<8x2x32xf32, #tpu.memory_space<vmem>>, vector<1x2x32xf32>,
    %c3 = arith.constant 3 : index
    %c0_55 = arith.constant 0 : index
    %c0_56 = arith.constant 0 : index
    %125 = vector.load %arg2[%c3, %c0_55, %c0_56] : memref<8x2x128xf32, #tpu.memory_space<vmem>>, vector<1x2x128xf32>
    %126 = vector.shape_cast %125 : vector<1x2x128xf32> to vector<2x128xf32>
    %127 = arith.truncf %121 : vector<2x32xf32> to vector<2x32xbf16>
    %c0_57 = arith.constant 0 : index
    %c0_58 = arith.constant 0 : index
    %128 = vector.load %arg3[%c0_57, %c0_58] : memref<32x128xbf16, #tpu.memory_space<vmem>>, vector<32x128xbf16>
    %cst_59 = arith.constant dense<0.000000e+00> : vector<2x128xf32>
    %129 = tpu.matmul %127, %128, %cst_59 {dimension_numbers = #tpu.dot_dimension_numbers<[1], [0], [0], [1], [0, 0, 1, 1], [], []>} : vector<2x32xbf16>, vector<32x128xbf16>, vector<2x128xf32> -> vector<2x128xf32>
    %130 = arith.addf %126, %129 : vector<2x128xf32>
    %131 = vector.extract_strided_slice %130 {offsets = [0, 0], sizes = [2, 32], strides = [1, 1]} : vector<2x128xf32> to vector<2x32xf32>
    %cst_60 = arith.constant 5.000000e-01 : f32
    %132 = vector.broadcast %cst_60 : f32 to vector<2x32xf32>
    %133 = arith.mulf %132, %131 : vector<2x32xf32>
    %134 = math.tanh %133 : vector<2x32xf32>
    %cst_61 = arith.constant 1.000000e+00 : f32
    %135 = vector.broadcast %cst_61 : f32 to vector<2x32xf32>
    %136 = arith.addf %134, %135 : vector<2x32xf32>
    %cst_62 = arith.constant 5.000000e-01 : f32
    %137 = vector.broadcast %cst_62 : f32 to vector<2x32xf32>
    %138 = arith.mulf %137, %136 : vector<2x32xf32>
    %139 = vector.extract_strided_slice %130 {offsets = [0, 32], sizes = [2, 32], strides = [1, 1]} : vector<2x128xf32> to vector<2x32xf32>
    %cst_63 = arith.constant 5.000000e-01 : f32
    %140 = vector.broadcast %cst_63 : f32 to vector<2x32xf32>
    %141 = arith.mulf %140, %139 : vector<2x32xf32>
    %142 = math.tanh %141 : vector<2x32xf32>
    %cst_64 = arith.constant 1.000000e+00 : f32
    %143 = vector.broadcast %cst_64 : f32 to vector<2x32xf32>
    %144 = arith.addf %142, %143 : vector<2x32xf32>
    %cst_65 = arith.constant 5.000000e-01 : f32
    %145 = vector.broadcast %cst_65 : f32 to vector<2x32xf32>
    %146 = arith.mulf %145, %144 : vector<2x32xf32>
    %147 = vector.extract_strided_slice %130 {offsets = [0, 64], sizes = [2, 32], strides = [1, 1]} : vector<2x128xf32> to vector<2x32xf32>
    %148 = math.tanh %147 : vector<2x32xf32>
    %149 = vector.extract_strided_slice %130 {offsets = [0, 96], sizes = [2, 32], strides = [1, 1]} : vector<2x128xf32> to vector<2x32xf32>
    %cst_66 = arith.constant 5.000000e-01 : f32
    %150 = vector.broadcast %cst_66 : f32 to vector<2x32xf32>
    %151 = arith.mulf %150, %149 : vector<2x32xf32>
    %152 = math.tanh %151 : vector<2x32xf32>
    %cst_67 = arith.constant 1.000000e+00 : f32
    %153 = vector.broadcast %cst_67 : f32 to vector<2x32xf32>
    %154 = arith.addf %152, %153 : vector<2x32xf32>
    %cst_68 = arith.constant 5.000000e-01 : f32
    %155 = vector.broadcast %cst_68 : f32 to vector<2x32xf32>
    %156 = arith.mulf %155, %154 : vector<2x32xf32>
    %157 = arith.mulf %146, %119 : vector<2x32xf32>
    %158 = arith.mulf %138, %148 : vector<2x32xf32>
    %159 = arith.addf %157, %158 : vector<2x32xf32>
    %160 = math.tanh %159 : vector<2x32xf32>
    %161 = arith.mulf %156, %160 : vector<2x32xf32>
    %c3_69 = arith.constant 3 : index
    %c0_70 = arith.constant 0 : index
    %c0_71 = arith.constant 0 : index
    %162 = vector.load %arg4[%c3_69, %c0_70, %c0_71] : memref<8x2x32xf32, #tpu.memory_space<vmem>>, vector<1x2x32xf32>
    %163 = vector.shape_cast %162 : vector<1x2x32xf32> to vector<2x32xf32>
    %164 = vector.shape_cast %161 : vector<2x32xf32> to vector<1x2x32xf32>
    tpu.vector_store %arg4[%c3_69, %c0_70, %c0_71], %164 {strides = array<i32>} : memref<8x2x32xf32, #tpu.memory_space<vmem>>, vector<1x2x32xf32>,
    %c4 = arith.constant 4 : index
    %c0_72 = arith.constant 0 : index
    %c0_73 = arith.constant 0 : index
    %165 = vector.load %arg2[%c4, %c0_72, %c0_73] : memref<8x2x128xf32, #tpu.memory_space<vmem>>, vector<1x2x128xf32>
    %166 = vector.shape_cast %165 : vector<1x2x128xf32> to vector<2x128xf32>
    %167 = arith.truncf %161 : vector<2x32xf32> to vector<2x32xbf16>
    %c0_74 = arith.constant 0 : index
    %c0_75 = arith.constant 0 : index
    %168 = vector.load %arg3[%c0_74, %c0_75] : memref<32x128xbf16, #tpu.memory_space<vmem>>, vector<32x128xbf16>
    %cst_76 = arith.constant dense<0.000000e+00> : vector<2x128xf32>
    %169 = tpu.matmul %167, %168, %cst_76 {dimension_numbers = #tpu.dot_dimension_numbers<[1], [0], [0], [1], [0, 0, 1, 1], [], []>} : vector<2x32xbf16>, vector<32x128xbf16>, vector<2x128xf32> -> vector<2x128xf32>
    %170 = arith.addf %166, %169 : vector<2x128xf32>
    %171 = vector.extract_strided_slice %170 {offsets = [0, 0], sizes = [2, 32], strides = [1, 1]} : vector<2x128xf32> to vector<2x32xf32>
    %cst_77 = arith.constant 5.000000e-01 : f32
    %172 = vector.broadcast %cst_77 : f32 to vector<2x32xf32>
    %173 = arith.mulf %172, %171 : vector<2x32xf32>
    %174 = math.tanh %173 : vector<2x32xf32>
    %cst_78 = arith.constant 1.000000e+00 : f32
    %175 = vector.broadcast %cst_78 : f32 to vector<2x32xf32>
    %176 = arith.addf %174, %175 : vector<2x32xf32>
    %cst_79 = arith.constant 5.000000e-01 : f32
    %177 = vector.broadcast %cst_79 : f32 to vector<2x32xf32>
    %178 = arith.mulf %177, %176 : vector<2x32xf32>
    %179 = vector.extract_strided_slice %170 {offsets = [0, 32], sizes = [2, 32], strides = [1, 1]} : vector<2x128xf32> to vector<2x32xf32>
    %cst_80 = arith.constant 5.000000e-01 : f32
    %180 = vector.broadcast %cst_80 : f32 to vector<2x32xf32>
    %181 = arith.mulf %180, %179 : vector<2x32xf32>
    %182 = math.tanh %181 : vector<2x32xf32>
    %cst_81 = arith.constant 1.000000e+00 : f32
    %183 = vector.broadcast %cst_81 : f32 to vector<2x32xf32>
    %184 = arith.addf %182, %183 : vector<2x32xf32>
    %cst_82 = arith.constant 5.000000e-01 : f32
    %185 = vector.broadcast %cst_82 : f32 to vector<2x32xf32>
    %186 = arith.mulf %185, %184 : vector<2x32xf32>
    %187 = vector.extract_strided_slice %170 {offsets = [0, 64], sizes = [2, 32], strides = [1, 1]} : vector<2x128xf32> to vector<2x32xf32>
    %188 = math.tanh %187 : vector<2x32xf32>
    %189 = vector.extract_strided_slice %170 {offsets = [0, 96], sizes = [2, 32], strides = [1, 1]} : vector<2x128xf32> to vector<2x32xf32>
    %cst_83 = arith.constant 5.000000e-01 : f32
    %190 = vector.broadcast %cst_83 : f32 to vector<2x32xf32>
    %191 = arith.mulf %190, %189 : vector<2x32xf32>
    %192 = math.tanh %191 : vector<2x32xf32>
    %cst_84 = arith.constant 1.000000e+00 : f32
    %193 = vector.broadcast %cst_84 : f32 to vector<2x32xf32>
    %194 = arith.addf %192, %193 : vector<2x32xf32>
    %cst_85 = arith.constant 5.000000e-01 : f32
    %195 = vector.broadcast %cst_85 : f32 to vector<2x32xf32>
    %196 = arith.mulf %195, %194 : vector<2x32xf32>
    %197 = arith.mulf %186, %159 : vector<2x32xf32>
    %198 = arith.mulf %178, %188 : vector<2x32xf32>
    %199 = arith.addf %197, %198 : vector<2x32xf32>
    %200 = math.tanh %199 : vector<2x32xf32>
    %201 = arith.mulf %196, %200 : vector<2x32xf32>
    %c4_86 = arith.constant 4 : index
    %c0_87 = arith.constant 0 : index
    %c0_88 = arith.constant 0 : index
    %202 = vector.load %arg4[%c4_86, %c0_87, %c0_88] : memref<8x2x32xf32, #tpu.memory_space<vmem>>, vector<1x2x32xf32>
    %203 = vector.shape_cast %202 : vector<1x2x32xf32> to vector<2x32xf32>
    %204 = vector.shape_cast %201 : vector<2x32xf32> to vector<1x2x32xf32>
    tpu.vector_store %arg4[%c4_86, %c0_87, %c0_88], %204 {strides = array<i32>} : memref<8x2x32xf32, #tpu.memory_space<vmem>>, vector<1x2x32xf32>,
    %c5 = arith.constant 5 : index
    %c0_89 = arith.constant 0 : index
    %c0_90 = arith.constant 0 : index
    %205 = vector.load %arg2[%c5, %c0_89, %c0_90] : memref<8x2x128xf32, #tpu.memory_space<vmem>>, vector<1x2x128xf32>
    %206 = vector.shape_cast %205 : vector<1x2x128xf32> to vector<2x128xf32>
    %207 = arith.truncf %201 : vector<2x32xf32> to vector<2x32xbf16>
    %c0_91 = arith.constant 0 : index
    %c0_92 = arith.constant 0 : index
    %208 = vector.load %arg3[%c0_91, %c0_92] : memref<32x128xbf16, #tpu.memory_space<vmem>>, vector<32x128xbf16>
    %cst_93 = arith.constant dense<0.000000e+00> : vector<2x128xf32>
    %209 = tpu.matmul %207, %208, %cst_93 {dimension_numbers = #tpu.dot_dimension_numbers<[1], [0], [0], [1], [0, 0, 1, 1], [], []>} : vector<2x32xbf16>, vector<32x128xbf16>, vector<2x128xf32> -> vector<2x128xf32>
    %210 = arith.addf %206, %209 : vector<2x128xf32>
    %211 = vector.extract_strided_slice %210 {offsets = [0, 0], sizes = [2, 32], strides = [1, 1]} : vector<2x128xf32> to vector<2x32xf32>
    %cst_94 = arith.constant 5.000000e-01 : f32
    %212 = vector.broadcast %cst_94 : f32 to vector<2x32xf32>
    %213 = arith.mulf %212, %211 : vector<2x32xf32>
    %214 = math.tanh %213 : vector<2x32xf32>
    %cst_95 = arith.constant 1.000000e+00 : f32
    %215 = vector.broadcast %cst_95 : f32 to vector<2x32xf32>
    %216 = arith.addf %214, %215 : vector<2x32xf32>
    %cst_96 = arith.constant 5.000000e-01 : f32
    %217 = vector.broadcast %cst_96 : f32 to vector<2x32xf32>
    %218 = arith.mulf %217, %216 : vector<2x32xf32>
    %219 = vector.extract_strided_slice %210 {offsets = [0, 32], sizes = [2, 32], strides = [1, 1]} : vector<2x128xf32> to vector<2x32xf32>
    %cst_97 = arith.constant 5.000000e-01 : f32
    %220 = vector.broadcast %cst_97 : f32 to vector<2x32xf32>
    %221 = arith.mulf %220, %219 : vector<2x32xf32>
    %222 = math.tanh %221 : vector<2x32xf32>
    %cst_98 = arith.constant 1.000000e+00 : f32
    %223 = vector.broadcast %cst_98 : f32 to vector<2x32xf32>
    %224 = arith.addf %222, %223 : vector<2x32xf32>
    %cst_99 = arith.constant 5.000000e-01 : f32
    %225 = vector.broadcast %cst_99 : f32 to vector<2x32xf32>
    %226 = arith.mulf %225, %224 : vector<2x32xf32>
    %227 = vector.extract_strided_slice %210 {offsets = [0, 64], sizes = [2, 32], strides = [1, 1]} : vector<2x128xf32> to vector<2x32xf32>
    %228 = math.tanh %227 : vector<2x32xf32>
    %229 = vector.extract_strided_slice %210 {offsets = [0, 96], sizes = [2, 32], strides = [1, 1]} : vector<2x128xf32> to vector<2x32xf32>
    %cst_100 = arith.constant 5.000000e-01 : f32
    %230 = vector.broadcast %cst_100 : f32 to vector<2x32xf32>
    %231 = arith.mulf %230, %229 : vector<2x32xf32>
    %232 = math.tanh %231 : vector<2x32xf32>
    %cst_101 = arith.constant 1.000000e+00 : f32
    %233 = vector.broadcast %cst_101 : f32 to vector<2x32xf32>
    %234 = arith.addf %232, %233 : vector<2x32xf32>
    %cst_102 = arith.constant 5.000000e-01 : f32
    %235 = vector.broadcast %cst_102 : f32 to vector<2x32xf32>
    %236 = arith.mulf %235, %234 : vector<2x32xf32>
    %237 = arith.mulf %226, %199 : vector<2x32xf32>
    %238 = arith.mulf %218, %228 : vector<2x32xf32>
    %239 = arith.addf %237, %238 : vector<2x32xf32>
    %240 = math.tanh %239 : vector<2x32xf32>
    %241 = arith.mulf %236, %240 : vector<2x32xf32>
    %c5_103 = arith.constant 5 : index
    %c0_104 = arith.constant 0 : index
    %c0_105 = arith.constant 0 : index
    %242 = vector.load %arg4[%c5_103, %c0_104, %c0_105] : memref<8x2x32xf32, #tpu.memory_space<vmem>>, vector<1x2x32xf32>
    %243 = vector.shape_cast %242 : vector<1x2x32xf32> to vector<2x32xf32>
    %244 = vector.shape_cast %241 : vector<2x32xf32> to vector<1x2x32xf32>
    tpu.vector_store %arg4[%c5_103, %c0_104, %c0_105], %244 {strides = array<i32>} : memref<8x2x32xf32, #tpu.memory_space<vmem>>, vector<1x2x32xf32>,
    %c6 = arith.constant 6 : index
    %c0_106 = arith.constant 0 : index
    %c0_107 = arith.constant 0 : index
    %245 = vector.load %arg2[%c6, %c0_106, %c0_107] : memref<8x2x128xf32, #tpu.memory_space<vmem>>, vector<1x2x128xf32>
    %246 = vector.shape_cast %245 : vector<1x2x128xf32> to vector<2x128xf32>
    %247 = arith.truncf %241 : vector<2x32xf32> to vector<2x32xbf16>
    %c0_108 = arith.constant 0 : index
    %c0_109 = arith.constant 0 : index
    %248 = vector.load %arg3[%c0_108, %c0_109] : memref<32x128xbf16, #tpu.memory_space<vmem>>, vector<32x128xbf16>
    %cst_110 = arith.constant dense<0.000000e+00> : vector<2x128xf32>
    %249 = tpu.matmul %247, %248, %cst_110 {dimension_numbers = #tpu.dot_dimension_numbers<[1], [0], [0], [1], [0, 0, 1, 1], [], []>} : vector<2x32xbf16>, vector<32x128xbf16>, vector<2x128xf32> -> vector<2x128xf32>
    %250 = arith.addf %246, %249 : vector<2x128xf32>
    %251 = vector.extract_strided_slice %250 {offsets = [0, 0], sizes = [2, 32], strides = [1, 1]} : vector<2x128xf32> to vector<2x32xf32>
    %cst_111 = arith.constant 5.000000e-01 : f32
    %252 = vector.broadcast %cst_111 : f32 to vector<2x32xf32>
    %253 = arith.mulf %252, %251 : vector<2x32xf32>
    %254 = math.tanh %253 : vector<2x32xf32>
    %cst_112 = arith.constant 1.000000e+00 : f32
    %255 = vector.broadcast %cst_112 : f32 to vector<2x32xf32>
    %256 = arith.addf %254, %255 : vector<2x32xf32>
    %cst_113 = arith.constant 5.000000e-01 : f32
    %257 = vector.broadcast %cst_113 : f32 to vector<2x32xf32>
    %258 = arith.mulf %257, %256 : vector<2x32xf32>
    %259 = vector.extract_strided_slice %250 {offsets = [0, 32], sizes = [2, 32], strides = [1, 1]} : vector<2x128xf32> to vector<2x32xf32>
    %cst_114 = arith.constant 5.000000e-01 : f32
    %260 = vector.broadcast %cst_114 : f32 to vector<2x32xf32>
    %261 = arith.mulf %260, %259 : vector<2x32xf32>
    %262 = math.tanh %261 : vector<2x32xf32>
    %cst_115 = arith.constant 1.000000e+00 : f32
    %263 = vector.broadcast %cst_115 : f32 to vector<2x32xf32>
    %264 = arith.addf %262, %263 : vector<2x32xf32>
    %cst_116 = arith.constant 5.000000e-01 : f32
    %265 = vector.broadcast %cst_116 : f32 to vector<2x32xf32>
    %266 = arith.mulf %265, %264 : vector<2x32xf32>
    %267 = vector.extract_strided_slice %250 {offsets = [0, 64], sizes = [2, 32], strides = [1, 1]} : vector<2x128xf32> to vector<2x32xf32>
    %268 = math.tanh %267 : vector<2x32xf32>
    %269 = vector.extract_strided_slice %250 {offsets = [0, 96], sizes = [2, 32], strides = [1, 1]} : vector<2x128xf32> to vector<2x32xf32>
    %cst_117 = arith.constant 5.000000e-01 : f32
    %270 = vector.broadcast %cst_117 : f32 to vector<2x32xf32>
    %271 = arith.mulf %270, %269 : vector<2x32xf32>
    %272 = math.tanh %271 : vector<2x32xf32>
    %cst_118 = arith.constant 1.000000e+00 : f32
    %273 = vector.broadcast %cst_118 : f32 to vector<2x32xf32>
    %274 = arith.addf %272, %273 : vector<2x32xf32>
    %cst_119 = arith.constant 5.000000e-01 : f32
    %275 = vector.broadcast %cst_119 : f32 to vector<2x32xf32>
    %276 = arith.mulf %275, %274 : vector<2x32xf32>
    %277 = arith.mulf %266, %239 : vector<2x32xf32>
    %278 = arith.mulf %258, %268 : vector<2x32xf32>
    %279 = arith.addf %277, %278 : vector<2x32xf32>
    %280 = math.tanh %279 : vector<2x32xf32>
    %281 = arith.mulf %276, %280 : vector<2x32xf32>
    %c6_120 = arith.constant 6 : index
    %c0_121 = arith.constant 0 : index
    %c0_122 = arith.constant 0 : index
    %282 = vector.load %arg4[%c6_120, %c0_121, %c0_122] : memref<8x2x32xf32, #tpu.memory_space<vmem>>, vector<1x2x32xf32>
    %283 = vector.shape_cast %282 : vector<1x2x32xf32> to vector<2x32xf32>
    %284 = vector.shape_cast %281 : vector<2x32xf32> to vector<1x2x32xf32>
    tpu.vector_store %arg4[%c6_120, %c0_121, %c0_122], %284 {strides = array<i32>} : memref<8x2x32xf32, #tpu.memory_space<vmem>>, vector<1x2x32xf32>,
    %c7 = arith.constant 7 : index
    %c0_123 = arith.constant 0 : index
    %c0_124 = arith.constant 0 : index
    %285 = vector.load %arg2[%c7, %c0_123, %c0_124] : memref<8x2x128xf32, #tpu.memory_space<vmem>>, vector<1x2x128xf32>
    %286 = vector.shape_cast %285 : vector<1x2x128xf32> to vector<2x128xf32>
    %287 = arith.truncf %281 : vector<2x32xf32> to vector<2x32xbf16>
    %c0_125 = arith.constant 0 : index
    %c0_126 = arith.constant 0 : index
    %288 = vector.load %arg3[%c0_125, %c0_126] : memref<32x128xbf16, #tpu.memory_space<vmem>>, vector<32x128xbf16>
    %cst_127 = arith.constant dense<0.000000e+00> : vector<2x128xf32>
    %289 = tpu.matmul %287, %288, %cst_127 {dimension_numbers = #tpu.dot_dimension_numbers<[1], [0], [0], [1], [0, 0, 1, 1], [], []>} : vector<2x32xbf16>, vector<32x128xbf16>, vector<2x128xf32> -> vector<2x128xf32>
    %290 = arith.addf %286, %289 : vector<2x128xf32>
    %291 = vector.extract_strided_slice %290 {offsets = [0, 0], sizes = [2, 32], strides = [1, 1]} : vector<2x128xf32> to vector<2x32xf32>
    %cst_128 = arith.constant 5.000000e-01 : f32
    %292 = vector.broadcast %cst_128 : f32 to vector<2x32xf32>
    %293 = arith.mulf %292, %291 : vector<2x32xf32>
    %294 = math.tanh %293 : vector<2x32xf32>
    %cst_129 = arith.constant 1.000000e+00 : f32
    %295 = vector.broadcast %cst_129 : f32 to vector<2x32xf32>
    %296 = arith.addf %294, %295 : vector<2x32xf32>
    %cst_130 = arith.constant 5.000000e-01 : f32
    %297 = vector.broadcast %cst_130 : f32 to vector<2x32xf32>
    %298 = arith.mulf %297, %296 : vector<2x32xf32>
    %299 = vector.extract_strided_slice %290 {offsets = [0, 32], sizes = [2, 32], strides = [1, 1]} : vector<2x128xf32> to vector<2x32xf32>
    %cst_131 = arith.constant 5.000000e-01 : f32
    %300 = vector.broadcast %cst_131 : f32 to vector<2x32xf32>
    %301 = arith.mulf %300, %299 : vector<2x32xf32>
    %302 = math.tanh %301 : vector<2x32xf32>
    %cst_132 = arith.constant 1.000000e+00 : f32
    %303 = vector.broadcast %cst_132 : f32 to vector<2x32xf32>
    %304 = arith.addf %302, %303 : vector<2x32xf32>
    %cst_133 = arith.constant 5.000000e-01 : f32
    %305 = vector.broadcast %cst_133 : f32 to vector<2x32xf32>
    %306 = arith.mulf %305, %304 : vector<2x32xf32>
    %307 = vector.extract_strided_slice %290 {offsets = [0, 64], sizes = [2, 32], strides = [1, 1]} : vector<2x128xf32> to vector<2x32xf32>
    %308 = math.tanh %307 : vector<2x32xf32>
    %309 = vector.extract_strided_slice %290 {offsets = [0, 96], sizes = [2, 32], strides = [1, 1]} : vector<2x128xf32> to vector<2x32xf32>
    %cst_134 = arith.constant 5.000000e-01 : f32
    %310 = vector.broadcast %cst_134 : f32 to vector<2x32xf32>
    %311 = arith.mulf %310, %309 : vector<2x32xf32>
    %312 = math.tanh %311 : vector<2x32xf32>
    %cst_135 = arith.constant 1.000000e+00 : f32
    %313 = vector.broadcast %cst_135 : f32 to vector<2x32xf32>
    %314 = arith.addf %312, %313 : vector<2x32xf32>
    %cst_136 = arith.constant 5.000000e-01 : f32
    %315 = vector.broadcast %cst_136 : f32 to vector<2x32xf32>
    %316 = arith.mulf %315, %314 : vector<2x32xf32>
    %317 = arith.mulf %306, %279 : vector<2x32xf32>
    %318 = arith.mulf %298, %308 : vector<2x32xf32>
    %319 = arith.addf %317, %318 : vector<2x32xf32>
    %320 = math.tanh %319 : vector<2x32xf32>
    %321 = arith.mulf %316, %320 : vector<2x32xf32>
    %c7_137 = arith.constant 7 : index
    %c0_138 = arith.constant 0 : index
    %c0_139 = arith.constant 0 : index
    %322 = vector.load %arg4[%c7_137, %c0_138, %c0_139] : memref<8x2x32xf32, #tpu.memory_space<vmem>>, vector<1x2x32xf32>
    %323 = vector.shape_cast %322 : vector<1x2x32xf32> to vector<2x32xf32>
    %324 = vector.shape_cast %321 : vector<2x32xf32> to vector<1x2x32xf32>
    tpu.vector_store %arg4[%c7_137, %c0_138, %c0_139], %324 {strides = array<i32>} : memref<8x2x32xf32, #tpu.memory_space<vmem>>, vector<1x2x32xf32>,
    %c0_140 = arith.constant 0 : index
    %c0_141 = arith.constant 0 : index
    %325 = vector.load %arg7[%c0_140, %c0_141] : memref<2x32xf32, #tpu.memory_space<vmem>>, vector<2x32xf32>
    tpu.vector_store %arg7[%c0_140, %c0_141], %321 {strides = array<i32>} : memref<2x32xf32, #tpu.memory_space<vmem>>, vector<2x32xf32>,
    %c0_142 = arith.constant 0 : index
    %c0_143 = arith.constant 0 : index
    %326 = vector.load %arg8[%c0_142, %c0_143] : memref<2x32xf32, #tpu.memory_space<vmem>>, vector<2x32xf32>
    tpu.vector_store %arg8[%c0_142, %c0_143], %319 {strides = array<i32>} : memref<2x32xf32, #tpu.memory_space<vmem>>, vector<2x32xf32>,
    %c0_i32_144 = arith.constant 0 : i32
    %327 = arith.cmpi eq, %arg1, %c0_i32_144 : i32
    %328 = arith.extui %327 : i1 to i32
    %c0_i32_145 = arith.constant 0 : i32
    %329 = arith.cmpi ne, %328, %c0_i32_145 : i32
    scf.if %329 {
      %c0_146 = arith.constant 0 : index
      %c0_147 = arith.constant 0 : index
      %330 = vector.load %arg5[%c0_146, %c0_147] : memref<2x32xf32, #tpu.memory_space<vmem>>, vector<2x32xf32>
      tpu.vector_store %arg5[%c0_146, %c0_147], %321 {strides = array<i32>} : memref<2x32xf32, #tpu.memory_space<vmem>>, vector<2x32xf32>,
      %c0_148 = arith.constant 0 : index
      %c0_149 = arith.constant 0 : index
      %331 = vector.load %arg6[%c0_148, %c0_149] : memref<2x32xf32, #tpu.memory_space<vmem>>, vector<2x32xf32>
      tpu.vector_store %arg6[%c0_148, %c0_149], %319 {strides = array<i32>} : memref<2x32xf32, #tpu.memory_space<vmem>>, vector<2x32xf32>,
    } else {
    }
    return
  }
  func.func @transform_0(%arg0: i32, %arg1: i32) -> (i32, i32, i32) {
    %c0_i32 = arith.constant 0 : i32
    %c0_i32_0 = arith.constant 0 : i32
    return %arg1, %arg0, %c0_i32 : i32, i32, i32
  }
  func.func @transform_1(%arg0: i32, %arg1: i32) -> (i32, i32) {
    %c0_i32 = arith.constant 0 : i32
    %c0_i32_0 = arith.constant 0 : i32
    %c0_i32_1 = arith.constant 0 : i32
    return %c0_i32, %c0_i32_0 : i32, i32
  }
  func.func @transform_2(%arg0: i32, %arg1: i32) -> (i32, i32, i32) {
    %c0_i32 = arith.constant 0 : i32
    %c0_i32_0 = arith.constant 0 : i32
    return %arg1, %arg0, %c0_i32 : i32, i32, i32
  }
  func.func @transform_3(%arg0: i32, %arg1: i32) -> (i32, i32) {
    %c0_i32 = arith.constant 0 : i32
    %c0_i32_0 = arith.constant 0 : i32
    return %arg0, %c0_i32 : i32, i32
  }
  func.func @transform_4(%arg0: i32, %arg1: i32) -> (i32, i32) {
    %c0_i32 = arith.constant 0 : i32
    %c0_i32_0 = arith.constant 0 : i32
    return %arg0, %c0_i32 : i32, i32
  }
}

module attributes {stable_mosaic.version = 11 : i64} {
  func.func @_lstm_rec_kernel(%arg0: i32, %arg1: i32, %arg2: memref<8x2x128xf32, #tpu.memory_space<vmem>>, %arg3: memref<32x128xbf16, #tpu.memory_space<vmem>>, %arg4: memref<2x8x32xf32, #tpu.memory_space<vmem>>, %arg5: memref<2x32xf32, #tpu.memory_space<vmem>>, %arg6: memref<2x32xf32, #tpu.memory_space<vmem>>, %arg7: memref<2x32xf32, #tpu.memory_space<vmem>>, %arg8: memref<2x32xf32, #tpu.memory_space<vmem>>) attributes {dimension_semantics = [#tpu.dimension_semantics<parallel>, #tpu.dimension_semantics<arbitrary>], iteration_bounds = array<i64: 1, 1>, scalar_prefetch = 0 : i64, scratch_operands = 2 : i64, tpu.core_type = #tpu.core_type<tc>, window_params = [{transform_indices = @transform_0, window_bounds = array<i64: 8, 2, 128>}, {pipeline_mode = #tpu.pipeline_mode<synchronous>, transform_indices = @transform_1, window_bounds = array<i64: 32, 128>}, {transform_indices = @transform_2, window_bounds = array<i64: 2, 8, 32>}, {transform_indices = @transform_3, window_bounds = array<i64: 2, 32>}, {transform_indices = @transform_4, window_bounds = array<i64: 2, 32>}]} {
    %c0_i32 = arith.constant 0 : i32
    %0 = arith.cmpi eq, %arg1, %c0_i32 : i32
    %1 = arith.extui %0 : i1 to i32
    %c0_i32_0 = arith.constant 0 : i32
    %2 = arith.cmpi ne, %1, %c0_i32_0 : i32
    scf.if %2 {
      %cst_146 = arith.constant 0.000000e+00 : f32
      %330 = vector.broadcast %cst_146 : f32 to vector<2x32xf32>
      %c0_147 = arith.constant 0 : index
      %c0_148 = arith.constant 0 : index
      %331 = vector.load %arg7[%c0_147, %c0_148] : memref<2x32xf32, #tpu.memory_space<vmem>>, vector<2x32xf32>
      tpu.vector_store %arg7[%c0_147, %c0_148], %330 {strides = array<i32>} : memref<2x32xf32, #tpu.memory_space<vmem>>, vector<2x32xf32>,
      %cst_149 = arith.constant 0.000000e+00 : f32
      %332 = vector.broadcast %cst_149 : f32 to vector<2x32xf32>
      %c0_150 = arith.constant 0 : index
      %c0_151 = arith.constant 0 : index
      %333 = vector.load %arg8[%c0_150, %c0_151] : memref<2x32xf32, #tpu.memory_space<vmem>>, vector<2x32xf32>
      tpu.vector_store %arg8[%c0_150, %c0_151], %332 {strides = array<i32>} : memref<2x32xf32, #tpu.memory_space<vmem>>, vector<2x32xf32>,
    } else {
    }
    %c0 = arith.constant 0 : index
    %c0_1 = arith.constant 0 : index
    %3 = vector.load %arg7[%c0, %c0_1] : memref<2x32xf32, #tpu.memory_space<vmem>>, vector<2x32xf32>
    %c0_2 = arith.constant 0 : index
    %c0_3 = arith.constant 0 : index
    %4 = vector.load %arg8[%c0_2, %c0_3] : memref<2x32xf32, #tpu.memory_space<vmem>>, vector<2x32xf32>
    %c0_4 = arith.constant 0 : index
    %c0_5 = arith.constant 0 : index
    %c0_6 = arith.constant 0 : index
    %5 = vector.load %arg2[%c0_4, %c0_5, %c0_6] : memref<8x2x128xf32, #tpu.memory_space<vmem>>, vector<1x2x128xf32>
    %6 = vector.shape_cast %5 : vector<1x2x128xf32> to vector<2x128xf32>
    %7 = arith.truncf %3 : vector<2x32xf32> to vector<2x32xbf16>
    %c0_7 = arith.constant 0 : index
    %c0_8 = arith.constant 0 : index
    %8 = vector.load %arg3[%c0_7, %c0_8] : memref<32x128xbf16, #tpu.memory_space<vmem>>, vector<32x128xbf16>
    %cst = arith.constant dense<0.000000e+00> : vector<2x128xf32>
    %9 = tpu.matmul %7, %8, %cst {dimension_numbers = #tpu.dot_dimension_numbers<[1], [0], [0], [1], [0, 0, 1, 1], [], []>} : vector<2x32xbf16>, vector<32x128xbf16>, vector<2x128xf32> -> vector<2x128xf32>
    %10 = arith.addf %6, %9 : vector<2x128xf32>
    %11 = vector.extract_strided_slice %10 {offsets = [0, 0], sizes = [2, 32], strides = [1, 1]} : vector<2x128xf32> to vector<2x32xf32>
    %cst_9 = arith.constant 5.000000e-01 : f32
    %12 = vector.broadcast %cst_9 : f32 to vector<2x32xf32>
    %13 = arith.mulf %12, %11 : vector<2x32xf32>
    %14 = math.tanh %13 : vector<2x32xf32>
    %cst_10 = arith.constant 1.000000e+00 : f32
    %15 = vector.broadcast %cst_10 : f32 to vector<2x32xf32>
    %16 = arith.addf %14, %15 : vector<2x32xf32>
    %cst_11 = arith.constant 5.000000e-01 : f32
    %17 = vector.broadcast %cst_11 : f32 to vector<2x32xf32>
    %18 = arith.mulf %17, %16 : vector<2x32xf32>
    %19 = vector.extract_strided_slice %10 {offsets = [0, 32], sizes = [2, 32], strides = [1, 1]} : vector<2x128xf32> to vector<2x32xf32>
    %cst_12 = arith.constant 5.000000e-01 : f32
    %20 = vector.broadcast %cst_12 : f32 to vector<2x32xf32>
    %21 = arith.mulf %20, %19 : vector<2x32xf32>
    %22 = math.tanh %21 : vector<2x32xf32>
    %cst_13 = arith.constant 1.000000e+00 : f32
    %23 = vector.broadcast %cst_13 : f32 to vector<2x32xf32>
    %24 = arith.addf %22, %23 : vector<2x32xf32>
    %cst_14 = arith.constant 5.000000e-01 : f32
    %25 = vector.broadcast %cst_14 : f32 to vector<2x32xf32>
    %26 = arith.mulf %25, %24 : vector<2x32xf32>
    %27 = vector.extract_strided_slice %10 {offsets = [0, 64], sizes = [2, 32], strides = [1, 1]} : vector<2x128xf32> to vector<2x32xf32>
    %28 = math.tanh %27 : vector<2x32xf32>
    %29 = vector.extract_strided_slice %10 {offsets = [0, 96], sizes = [2, 32], strides = [1, 1]} : vector<2x128xf32> to vector<2x32xf32>
    %cst_15 = arith.constant 5.000000e-01 : f32
    %30 = vector.broadcast %cst_15 : f32 to vector<2x32xf32>
    %31 = arith.mulf %30, %29 : vector<2x32xf32>
    %32 = math.tanh %31 : vector<2x32xf32>
    %cst_16 = arith.constant 1.000000e+00 : f32
    %33 = vector.broadcast %cst_16 : f32 to vector<2x32xf32>
    %34 = arith.addf %32, %33 : vector<2x32xf32>
    %cst_17 = arith.constant 5.000000e-01 : f32
    %35 = vector.broadcast %cst_17 : f32 to vector<2x32xf32>
    %36 = arith.mulf %35, %34 : vector<2x32xf32>
    %37 = arith.mulf %26, %4 : vector<2x32xf32>
    %38 = arith.mulf %18, %28 : vector<2x32xf32>
    %39 = arith.addf %37, %38 : vector<2x32xf32>
    %40 = math.tanh %39 : vector<2x32xf32>
    %41 = arith.mulf %36, %40 : vector<2x32xf32>
    %c0_18 = arith.constant 0 : index
    %c0_19 = arith.constant 0 : index
    %c0_20 = arith.constant 0 : index
    %42 = vector.load %arg4[%c0_18, %c0_19, %c0_20] : memref<2x8x32xf32, #tpu.memory_space<vmem>>, vector<2x1x32xf32>
    %43 = vector.shape_cast %42 : vector<2x1x32xf32> to vector<2x32xf32>
    %44 = vector.shape_cast %41 : vector<2x32xf32> to vector<2x1x32xf32>
    tpu.vector_store %arg4[%c0_18, %c0_19, %c0_20], %44 {strides = array<i32>} : memref<2x8x32xf32, #tpu.memory_space<vmem>>, vector<2x1x32xf32>,
    %c1 = arith.constant 1 : index
    %c0_21 = arith.constant 0 : index
    %c0_22 = arith.constant 0 : index
    %45 = vector.load %arg2[%c1, %c0_21, %c0_22] : memref<8x2x128xf32, #tpu.memory_space<vmem>>, vector<1x2x128xf32>
    %46 = vector.shape_cast %45 : vector<1x2x128xf32> to vector<2x128xf32>
    %47 = arith.truncf %41 : vector<2x32xf32> to vector<2x32xbf16>
    %c0_23 = arith.constant 0 : index
    %c0_24 = arith.constant 0 : index
    %48 = vector.load %arg3[%c0_23, %c0_24] : memref<32x128xbf16, #tpu.memory_space<vmem>>, vector<32x128xbf16>
    %cst_25 = arith.constant dense<0.000000e+00> : vector<2x128xf32>
    %49 = tpu.matmul %47, %48, %cst_25 {dimension_numbers = #tpu.dot_dimension_numbers<[1], [0], [0], [1], [0, 0, 1, 1], [], []>} : vector<2x32xbf16>, vector<32x128xbf16>, vector<2x128xf32> -> vector<2x128xf32>
    %50 = arith.addf %46, %49 : vector<2x128xf32>
    %51 = vector.extract_strided_slice %50 {offsets = [0, 0], sizes = [2, 32], strides = [1, 1]} : vector<2x128xf32> to vector<2x32xf32>
    %cst_26 = arith.constant 5.000000e-01 : f32
    %52 = vector.broadcast %cst_26 : f32 to vector<2x32xf32>
    %53 = arith.mulf %52, %51 : vector<2x32xf32>
    %54 = math.tanh %53 : vector<2x32xf32>
    %cst_27 = arith.constant 1.000000e+00 : f32
    %55 = vector.broadcast %cst_27 : f32 to vector<2x32xf32>
    %56 = arith.addf %54, %55 : vector<2x32xf32>
    %cst_28 = arith.constant 5.000000e-01 : f32
    %57 = vector.broadcast %cst_28 : f32 to vector<2x32xf32>
    %58 = arith.mulf %57, %56 : vector<2x32xf32>
    %59 = vector.extract_strided_slice %50 {offsets = [0, 32], sizes = [2, 32], strides = [1, 1]} : vector<2x128xf32> to vector<2x32xf32>
    %cst_29 = arith.constant 5.000000e-01 : f32
    %60 = vector.broadcast %cst_29 : f32 to vector<2x32xf32>
    %61 = arith.mulf %60, %59 : vector<2x32xf32>
    %62 = math.tanh %61 : vector<2x32xf32>
    %cst_30 = arith.constant 1.000000e+00 : f32
    %63 = vector.broadcast %cst_30 : f32 to vector<2x32xf32>
    %64 = arith.addf %62, %63 : vector<2x32xf32>
    %cst_31 = arith.constant 5.000000e-01 : f32
    %65 = vector.broadcast %cst_31 : f32 to vector<2x32xf32>
    %66 = arith.mulf %65, %64 : vector<2x32xf32>
    %67 = vector.extract_strided_slice %50 {offsets = [0, 64], sizes = [2, 32], strides = [1, 1]} : vector<2x128xf32> to vector<2x32xf32>
    %68 = math.tanh %67 : vector<2x32xf32>
    %69 = vector.extract_strided_slice %50 {offsets = [0, 96], sizes = [2, 32], strides = [1, 1]} : vector<2x128xf32> to vector<2x32xf32>
    %cst_32 = arith.constant 5.000000e-01 : f32
    %70 = vector.broadcast %cst_32 : f32 to vector<2x32xf32>
    %71 = arith.mulf %70, %69 : vector<2x32xf32>
    %72 = math.tanh %71 : vector<2x32xf32>
    %cst_33 = arith.constant 1.000000e+00 : f32
    %73 = vector.broadcast %cst_33 : f32 to vector<2x32xf32>
    %74 = arith.addf %72, %73 : vector<2x32xf32>
    %cst_34 = arith.constant 5.000000e-01 : f32
    %75 = vector.broadcast %cst_34 : f32 to vector<2x32xf32>
    %76 = arith.mulf %75, %74 : vector<2x32xf32>
    %77 = arith.mulf %66, %39 : vector<2x32xf32>
    %78 = arith.mulf %58, %68 : vector<2x32xf32>
    %79 = arith.addf %77, %78 : vector<2x32xf32>
    %80 = math.tanh %79 : vector<2x32xf32>
    %81 = arith.mulf %76, %80 : vector<2x32xf32>
    %c0_35 = arith.constant 0 : index
    %c1_36 = arith.constant 1 : index
    %c0_37 = arith.constant 0 : index
    %82 = vector.load %arg4[%c0_35, %c1_36, %c0_37] : memref<2x8x32xf32, #tpu.memory_space<vmem>>, vector<2x1x32xf32>
    %83 = vector.shape_cast %82 : vector<2x1x32xf32> to vector<2x32xf32>
    %84 = vector.shape_cast %81 : vector<2x32xf32> to vector<2x1x32xf32>
    tpu.vector_store %arg4[%c0_35, %c1_36, %c0_37], %84 {strides = array<i32>} : memref<2x8x32xf32, #tpu.memory_space<vmem>>, vector<2x1x32xf32>,
    %c2 = arith.constant 2 : index
    %c0_38 = arith.constant 0 : index
    %c0_39 = arith.constant 0 : index
    %85 = vector.load %arg2[%c2, %c0_38, %c0_39] : memref<8x2x128xf32, #tpu.memory_space<vmem>>, vector<1x2x128xf32>
    %86 = vector.shape_cast %85 : vector<1x2x128xf32> to vector<2x128xf32>
    %87 = arith.truncf %81 : vector<2x32xf32> to vector<2x32xbf16>
    %c0_40 = arith.constant 0 : index
    %c0_41 = arith.constant 0 : index
    %88 = vector.load %arg3[%c0_40, %c0_41] : memref<32x128xbf16, #tpu.memory_space<vmem>>, vector<32x128xbf16>
    %cst_42 = arith.constant dense<0.000000e+00> : vector<2x128xf32>
    %89 = tpu.matmul %87, %88, %cst_42 {dimension_numbers = #tpu.dot_dimension_numbers<[1], [0], [0], [1], [0, 0, 1, 1], [], []>} : vector<2x32xbf16>, vector<32x128xbf16>, vector<2x128xf32> -> vector<2x128xf32>
    %90 = arith.addf %86, %89 : vector<2x128xf32>
    %91 = vector.extract_strided_slice %90 {offsets = [0, 0], sizes = [2, 32], strides = [1, 1]} : vector<2x128xf32> to vector<2x32xf32>
    %cst_43 = arith.constant 5.000000e-01 : f32
    %92 = vector.broadcast %cst_43 : f32 to vector<2x32xf32>
    %93 = arith.mulf %92, %91 : vector<2x32xf32>
    %94 = math.tanh %93 : vector<2x32xf32>
    %cst_44 = arith.constant 1.000000e+00 : f32
    %95 = vector.broadcast %cst_44 : f32 to vector<2x32xf32>
    %96 = arith.addf %94, %95 : vector<2x32xf32>
    %cst_45 = arith.constant 5.000000e-01 : f32
    %97 = vector.broadcast %cst_45 : f32 to vector<2x32xf32>
    %98 = arith.mulf %97, %96 : vector<2x32xf32>
    %99 = vector.extract_strided_slice %90 {offsets = [0, 32], sizes = [2, 32], strides = [1, 1]} : vector<2x128xf32> to vector<2x32xf32>
    %cst_46 = arith.constant 5.000000e-01 : f32
    %100 = vector.broadcast %cst_46 : f32 to vector<2x32xf32>
    %101 = arith.mulf %100, %99 : vector<2x32xf32>
    %102 = math.tanh %101 : vector<2x32xf32>
    %cst_47 = arith.constant 1.000000e+00 : f32
    %103 = vector.broadcast %cst_47 : f32 to vector<2x32xf32>
    %104 = arith.addf %102, %103 : vector<2x32xf32>
    %cst_48 = arith.constant 5.000000e-01 : f32
    %105 = vector.broadcast %cst_48 : f32 to vector<2x32xf32>
    %106 = arith.mulf %105, %104 : vector<2x32xf32>
    %107 = vector.extract_strided_slice %90 {offsets = [0, 64], sizes = [2, 32], strides = [1, 1]} : vector<2x128xf32> to vector<2x32xf32>
    %108 = math.tanh %107 : vector<2x32xf32>
    %109 = vector.extract_strided_slice %90 {offsets = [0, 96], sizes = [2, 32], strides = [1, 1]} : vector<2x128xf32> to vector<2x32xf32>
    %cst_49 = arith.constant 5.000000e-01 : f32
    %110 = vector.broadcast %cst_49 : f32 to vector<2x32xf32>
    %111 = arith.mulf %110, %109 : vector<2x32xf32>
    %112 = math.tanh %111 : vector<2x32xf32>
    %cst_50 = arith.constant 1.000000e+00 : f32
    %113 = vector.broadcast %cst_50 : f32 to vector<2x32xf32>
    %114 = arith.addf %112, %113 : vector<2x32xf32>
    %cst_51 = arith.constant 5.000000e-01 : f32
    %115 = vector.broadcast %cst_51 : f32 to vector<2x32xf32>
    %116 = arith.mulf %115, %114 : vector<2x32xf32>
    %117 = arith.mulf %106, %79 : vector<2x32xf32>
    %118 = arith.mulf %98, %108 : vector<2x32xf32>
    %119 = arith.addf %117, %118 : vector<2x32xf32>
    %120 = math.tanh %119 : vector<2x32xf32>
    %121 = arith.mulf %116, %120 : vector<2x32xf32>
    %c0_52 = arith.constant 0 : index
    %c2_53 = arith.constant 2 : index
    %c0_54 = arith.constant 0 : index
    %122 = vector.load %arg4[%c0_52, %c2_53, %c0_54] : memref<2x8x32xf32, #tpu.memory_space<vmem>>, vector<2x1x32xf32>
    %123 = vector.shape_cast %122 : vector<2x1x32xf32> to vector<2x32xf32>
    %124 = vector.shape_cast %121 : vector<2x32xf32> to vector<2x1x32xf32>
    tpu.vector_store %arg4[%c0_52, %c2_53, %c0_54], %124 {strides = array<i32>} : memref<2x8x32xf32, #tpu.memory_space<vmem>>, vector<2x1x32xf32>,
    %c3 = arith.constant 3 : index
    %c0_55 = arith.constant 0 : index
    %c0_56 = arith.constant 0 : index
    %125 = vector.load %arg2[%c3, %c0_55, %c0_56] : memref<8x2x128xf32, #tpu.memory_space<vmem>>, vector<1x2x128xf32>
    %126 = vector.shape_cast %125 : vector<1x2x128xf32> to vector<2x128xf32>
    %127 = arith.truncf %121 : vector<2x32xf32> to vector<2x32xbf16>
    %c0_57 = arith.constant 0 : index
    %c0_58 = arith.constant 0 : index
    %128 = vector.load %arg3[%c0_57, %c0_58] : memref<32x128xbf16, #tpu.memory_space<vmem>>, vector<32x128xbf16>
    %cst_59 = arith.constant dense<0.000000e+00> : vector<2x128xf32>
    %129 = tpu.matmul %127, %128, %cst_59 {dimension_numbers = #tpu.dot_dimension_numbers<[1], [0], [0], [1], [0, 0, 1, 1], [], []>} : vector<2x32xbf16>, vector<32x128xbf16>, vector<2x128xf32> -> vector<2x128xf32>
    %130 = arith.addf %126, %129 : vector<2x128xf32>
    %131 = vector.extract_strided_slice %130 {offsets = [0, 0], sizes = [2, 32], strides = [1, 1]} : vector<2x128xf32> to vector<2x32xf32>
    %cst_60 = arith.constant 5.000000e-01 : f32
    %132 = vector.broadcast %cst_60 : f32 to vector<2x32xf32>
    %133 = arith.mulf %132, %131 : vector<2x32xf32>
    %134 = math.tanh %133 : vector<2x32xf32>
    %cst_61 = arith.constant 1.000000e+00 : f32
    %135 = vector.broadcast %cst_61 : f32 to vector<2x32xf32>
    %136 = arith.addf %134, %135 : vector<2x32xf32>
    %cst_62 = arith.constant 5.000000e-01 : f32
    %137 = vector.broadcast %cst_62 : f32 to vector<2x32xf32>
    %138 = arith.mulf %137, %136 : vector<2x32xf32>
    %139 = vector.extract_strided_slice %130 {offsets = [0, 32], sizes = [2, 32], strides = [1, 1]} : vector<2x128xf32> to vector<2x32xf32>
    %cst_63 = arith.constant 5.000000e-01 : f32
    %140 = vector.broadcast %cst_63 : f32 to vector<2x32xf32>
    %141 = arith.mulf %140, %139 : vector<2x32xf32>
    %142 = math.tanh %141 : vector<2x32xf32>
    %cst_64 = arith.constant 1.000000e+00 : f32
    %143 = vector.broadcast %cst_64 : f32 to vector<2x32xf32>
    %144 = arith.addf %142, %143 : vector<2x32xf32>
    %cst_65 = arith.constant 5.000000e-01 : f32
    %145 = vector.broadcast %cst_65 : f32 to vector<2x32xf32>
    %146 = arith.mulf %145, %144 : vector<2x32xf32>
    %147 = vector.extract_strided_slice %130 {offsets = [0, 64], sizes = [2, 32], strides = [1, 1]} : vector<2x128xf32> to vector<2x32xf32>
    %148 = math.tanh %147 : vector<2x32xf32>
    %149 = vector.extract_strided_slice %130 {offsets = [0, 96], sizes = [2, 32], strides = [1, 1]} : vector<2x128xf32> to vector<2x32xf32>
    %cst_66 = arith.constant 5.000000e-01 : f32
    %150 = vector.broadcast %cst_66 : f32 to vector<2x32xf32>
    %151 = arith.mulf %150, %149 : vector<2x32xf32>
    %152 = math.tanh %151 : vector<2x32xf32>
    %cst_67 = arith.constant 1.000000e+00 : f32
    %153 = vector.broadcast %cst_67 : f32 to vector<2x32xf32>
    %154 = arith.addf %152, %153 : vector<2x32xf32>
    %cst_68 = arith.constant 5.000000e-01 : f32
    %155 = vector.broadcast %cst_68 : f32 to vector<2x32xf32>
    %156 = arith.mulf %155, %154 : vector<2x32xf32>
    %157 = arith.mulf %146, %119 : vector<2x32xf32>
    %158 = arith.mulf %138, %148 : vector<2x32xf32>
    %159 = arith.addf %157, %158 : vector<2x32xf32>
    %160 = math.tanh %159 : vector<2x32xf32>
    %161 = arith.mulf %156, %160 : vector<2x32xf32>
    %c0_69 = arith.constant 0 : index
    %c3_70 = arith.constant 3 : index
    %c0_71 = arith.constant 0 : index
    %162 = vector.load %arg4[%c0_69, %c3_70, %c0_71] : memref<2x8x32xf32, #tpu.memory_space<vmem>>, vector<2x1x32xf32>
    %163 = vector.shape_cast %162 : vector<2x1x32xf32> to vector<2x32xf32>
    %164 = vector.shape_cast %161 : vector<2x32xf32> to vector<2x1x32xf32>
    tpu.vector_store %arg4[%c0_69, %c3_70, %c0_71], %164 {strides = array<i32>} : memref<2x8x32xf32, #tpu.memory_space<vmem>>, vector<2x1x32xf32>,
    %c4 = arith.constant 4 : index
    %c0_72 = arith.constant 0 : index
    %c0_73 = arith.constant 0 : index
    %165 = vector.load %arg2[%c4, %c0_72, %c0_73] : memref<8x2x128xf32, #tpu.memory_space<vmem>>, vector<1x2x128xf32>
    %166 = vector.shape_cast %165 : vector<1x2x128xf32> to vector<2x128xf32>
    %167 = arith.truncf %161 : vector<2x32xf32> to vector<2x32xbf16>
    %c0_74 = arith.constant 0 : index
    %c0_75 = arith.constant 0 : index
    %168 = vector.load %arg3[%c0_74, %c0_75] : memref<32x128xbf16, #tpu.memory_space<vmem>>, vector<32x128xbf16>
    %cst_76 = arith.constant dense<0.000000e+00> : vector<2x128xf32>
    %169 = tpu.matmul %167, %168, %cst_76 {dimension_numbers = #tpu.dot_dimension_numbers<[1], [0], [0], [1], [0, 0, 1, 1], [], []>} : vector<2x32xbf16>, vector<32x128xbf16>, vector<2x128xf32> -> vector<2x128xf32>
    %170 = arith.addf %166, %169 : vector<2x128xf32>
    %171 = vector.extract_strided_slice %170 {offsets = [0, 0], sizes = [2, 32], strides = [1, 1]} : vector<2x128xf32> to vector<2x32xf32>
    %cst_77 = arith.constant 5.000000e-01 : f32
    %172 = vector.broadcast %cst_77 : f32 to vector<2x32xf32>
    %173 = arith.mulf %172, %171 : vector<2x32xf32>
    %174 = math.tanh %173 : vector<2x32xf32>
    %cst_78 = arith.constant 1.000000e+00 : f32
    %175 = vector.broadcast %cst_78 : f32 to vector<2x32xf32>
    %176 = arith.addf %174, %175 : vector<2x32xf32>
    %cst_79 = arith.constant 5.000000e-01 : f32
    %177 = vector.broadcast %cst_79 : f32 to vector<2x32xf32>
    %178 = arith.mulf %177, %176 : vector<2x32xf32>
    %179 = vector.extract_strided_slice %170 {offsets = [0, 32], sizes = [2, 32], strides = [1, 1]} : vector<2x128xf32> to vector<2x32xf32>
    %cst_80 = arith.constant 5.000000e-01 : f32
    %180 = vector.broadcast %cst_80 : f32 to vector<2x32xf32>
    %181 = arith.mulf %180, %179 : vector<2x32xf32>
    %182 = math.tanh %181 : vector<2x32xf32>
    %cst_81 = arith.constant 1.000000e+00 : f32
    %183 = vector.broadcast %cst_81 : f32 to vector<2x32xf32>
    %184 = arith.addf %182, %183 : vector<2x32xf32>
    %cst_82 = arith.constant 5.000000e-01 : f32
    %185 = vector.broadcast %cst_82 : f32 to vector<2x32xf32>
    %186 = arith.mulf %185, %184 : vector<2x32xf32>
    %187 = vector.extract_strided_slice %170 {offsets = [0, 64], sizes = [2, 32], strides = [1, 1]} : vector<2x128xf32> to vector<2x32xf32>
    %188 = math.tanh %187 : vector<2x32xf32>
    %189 = vector.extract_strided_slice %170 {offsets = [0, 96], sizes = [2, 32], strides = [1, 1]} : vector<2x128xf32> to vector<2x32xf32>
    %cst_83 = arith.constant 5.000000e-01 : f32
    %190 = vector.broadcast %cst_83 : f32 to vector<2x32xf32>
    %191 = arith.mulf %190, %189 : vector<2x32xf32>
    %192 = math.tanh %191 : vector<2x32xf32>
    %cst_84 = arith.constant 1.000000e+00 : f32
    %193 = vector.broadcast %cst_84 : f32 to vector<2x32xf32>
    %194 = arith.addf %192, %193 : vector<2x32xf32>
    %cst_85 = arith.constant 5.000000e-01 : f32
    %195 = vector.broadcast %cst_85 : f32 to vector<2x32xf32>
    %196 = arith.mulf %195, %194 : vector<2x32xf32>
    %197 = arith.mulf %186, %159 : vector<2x32xf32>
    %198 = arith.mulf %178, %188 : vector<2x32xf32>
    %199 = arith.addf %197, %198 : vector<2x32xf32>
    %200 = math.tanh %199 : vector<2x32xf32>
    %201 = arith.mulf %196, %200 : vector<2x32xf32>
    %c0_86 = arith.constant 0 : index
    %c4_87 = arith.constant 4 : index
    %c0_88 = arith.constant 0 : index
    %202 = vector.load %arg4[%c0_86, %c4_87, %c0_88] : memref<2x8x32xf32, #tpu.memory_space<vmem>>, vector<2x1x32xf32>
    %203 = vector.shape_cast %202 : vector<2x1x32xf32> to vector<2x32xf32>
    %204 = vector.shape_cast %201 : vector<2x32xf32> to vector<2x1x32xf32>
    tpu.vector_store %arg4[%c0_86, %c4_87, %c0_88], %204 {strides = array<i32>} : memref<2x8x32xf32, #tpu.memory_space<vmem>>, vector<2x1x32xf32>,
    %c5 = arith.constant 5 : index
    %c0_89 = arith.constant 0 : index
    %c0_90 = arith.constant 0 : index
    %205 = vector.load %arg2[%c5, %c0_89, %c0_90] : memref<8x2x128xf32, #tpu.memory_space<vmem>>, vector<1x2x128xf32>
    %206 = vector.shape_cast %205 : vector<1x2x128xf32> to vector<2x128xf32>
    %207 = arith.truncf %201 : vector<2x32xf32> to vector<2x32xbf16>
    %c0_91 = arith.constant 0 : index
    %c0_92 = arith.constant 0 : index
    %208 = vector.load %arg3[%c0_91, %c0_92] : memref<32x128xbf16, #tpu.memory_space<vmem>>, vector<32x128xbf16>
    %cst_93 = arith.constant dense<0.000000e+00> : vector<2x128xf32>
    %209 = tpu.matmul %207, %208, %cst_93 {dimension_numbers = #tpu.dot_dimension_numbers<[1], [0], [0], [1], [0, 0, 1, 1], [], []>} : vector<2x32xbf16>, vector<32x128xbf16>, vector<2x128xf32> -> vector<2x128xf32>
    %210 = arith.addf %206, %209 : vector<2x128xf32>
    %211 = vector.extract_strided_slice %210 {offsets = [0, 0], sizes = [2, 32], strides = [1, 1]} : vector<2x128xf32> to vector<2x32xf32>
    %cst_94 = arith.constant 5.000000e-01 : f32
    %212 = vector.broadcast %cst_94 : f32 to vector<2x32xf32>
    %213 = arith.mulf %212, %211 : vector<2x32xf32>
    %214 = math.tanh %213 : vector<2x32xf32>
    %cst_95 = arith.constant 1.000000e+00 : f32
    %215 = vector.broadcast %cst_95 : f32 to vector<2x32xf32>
    %216 = arith.addf %214, %215 : vector<2x32xf32>
    %cst_96 = arith.constant 5.000000e-01 : f32
    %217 = vector.broadcast %cst_96 : f32 to vector<2x32xf32>
    %218 = arith.mulf %217, %216 : vector<2x32xf32>
    %219 = vector.extract_strided_slice %210 {offsets = [0, 32], sizes = [2, 32], strides = [1, 1]} : vector<2x128xf32> to vector<2x32xf32>
    %cst_97 = arith.constant 5.000000e-01 : f32
    %220 = vector.broadcast %cst_97 : f32 to vector<2x32xf32>
    %221 = arith.mulf %220, %219 : vector<2x32xf32>
    %222 = math.tanh %221 : vector<2x32xf32>
    %cst_98 = arith.constant 1.000000e+00 : f32
    %223 = vector.broadcast %cst_98 : f32 to vector<2x32xf32>
    %224 = arith.addf %222, %223 : vector<2x32xf32>
    %cst_99 = arith.constant 5.000000e-01 : f32
    %225 = vector.broadcast %cst_99 : f32 to vector<2x32xf32>
    %226 = arith.mulf %225, %224 : vector<2x32xf32>
    %227 = vector.extract_strided_slice %210 {offsets = [0, 64], sizes = [2, 32], strides = [1, 1]} : vector<2x128xf32> to vector<2x32xf32>
    %228 = math.tanh %227 : vector<2x32xf32>
    %229 = vector.extract_strided_slice %210 {offsets = [0, 96], sizes = [2, 32], strides = [1, 1]} : vector<2x128xf32> to vector<2x32xf32>
    %cst_100 = arith.constant 5.000000e-01 : f32
    %230 = vector.broadcast %cst_100 : f32 to vector<2x32xf32>
    %231 = arith.mulf %230, %229 : vector<2x32xf32>
    %232 = math.tanh %231 : vector<2x32xf32>
    %cst_101 = arith.constant 1.000000e+00 : f32
    %233 = vector.broadcast %cst_101 : f32 to vector<2x32xf32>
    %234 = arith.addf %232, %233 : vector<2x32xf32>
    %cst_102 = arith.constant 5.000000e-01 : f32
    %235 = vector.broadcast %cst_102 : f32 to vector<2x32xf32>
    %236 = arith.mulf %235, %234 : vector<2x32xf32>
    %237 = arith.mulf %226, %199 : vector<2x32xf32>
    %238 = arith.mulf %218, %228 : vector<2x32xf32>
    %239 = arith.addf %237, %238 : vector<2x32xf32>
    %240 = math.tanh %239 : vector<2x32xf32>
    %241 = arith.mulf %236, %240 : vector<2x32xf32>
    %c0_103 = arith.constant 0 : index
    %c5_104 = arith.constant 5 : index
    %c0_105 = arith.constant 0 : index
    %242 = vector.load %arg4[%c0_103, %c5_104, %c0_105] : memref<2x8x32xf32, #tpu.memory_space<vmem>>, vector<2x1x32xf32>
    %243 = vector.shape_cast %242 : vector<2x1x32xf32> to vector<2x32xf32>
    %244 = vector.shape_cast %241 : vector<2x32xf32> to vector<2x1x32xf32>
    tpu.vector_store %arg4[%c0_103, %c5_104, %c0_105], %244 {strides = array<i32>} : memref<2x8x32xf32, #tpu.memory_space<vmem>>, vector<2x1x32xf32>,
    %c6 = arith.constant 6 : index
    %c0_106 = arith.constant 0 : index
    %c0_107 = arith.constant 0 : index
    %245 = vector.load %arg2[%c6, %c0_106, %c0_107] : memref<8x2x128xf32, #tpu.memory_space<vmem>>, vector<1x2x128xf32>
    %246 = vector.shape_cast %245 : vector<1x2x128xf32> to vector<2x128xf32>
    %247 = arith.truncf %241 : vector<2x32xf32> to vector<2x32xbf16>
    %c0_108 = arith.constant 0 : index
    %c0_109 = arith.constant 0 : index
    %248 = vector.load %arg3[%c0_108, %c0_109] : memref<32x128xbf16, #tpu.memory_space<vmem>>, vector<32x128xbf16>
    %cst_110 = arith.constant dense<0.000000e+00> : vector<2x128xf32>
    %249 = tpu.matmul %247, %248, %cst_110 {dimension_numbers = #tpu.dot_dimension_numbers<[1], [0], [0], [1], [0, 0, 1, 1], [], []>} : vector<2x32xbf16>, vector<32x128xbf16>, vector<2x128xf32> -> vector<2x128xf32>
    %250 = arith.addf %246, %249 : vector<2x128xf32>
    %251 = vector.extract_strided_slice %250 {offsets = [0, 0], sizes = [2, 32], strides = [1, 1]} : vector<2x128xf32> to vector<2x32xf32>
    %cst_111 = arith.constant 5.000000e-01 : f32
    %252 = vector.broadcast %cst_111 : f32 to vector<2x32xf32>
    %253 = arith.mulf %252, %251 : vector<2x32xf32>
    %254 = math.tanh %253 : vector<2x32xf32>
    %cst_112 = arith.constant 1.000000e+00 : f32
    %255 = vector.broadcast %cst_112 : f32 to vector<2x32xf32>
    %256 = arith.addf %254, %255 : vector<2x32xf32>
    %cst_113 = arith.constant 5.000000e-01 : f32
    %257 = vector.broadcast %cst_113 : f32 to vector<2x32xf32>
    %258 = arith.mulf %257, %256 : vector<2x32xf32>
    %259 = vector.extract_strided_slice %250 {offsets = [0, 32], sizes = [2, 32], strides = [1, 1]} : vector<2x128xf32> to vector<2x32xf32>
    %cst_114 = arith.constant 5.000000e-01 : f32
    %260 = vector.broadcast %cst_114 : f32 to vector<2x32xf32>
    %261 = arith.mulf %260, %259 : vector<2x32xf32>
    %262 = math.tanh %261 : vector<2x32xf32>
    %cst_115 = arith.constant 1.000000e+00 : f32
    %263 = vector.broadcast %cst_115 : f32 to vector<2x32xf32>
    %264 = arith.addf %262, %263 : vector<2x32xf32>
    %cst_116 = arith.constant 5.000000e-01 : f32
    %265 = vector.broadcast %cst_116 : f32 to vector<2x32xf32>
    %266 = arith.mulf %265, %264 : vector<2x32xf32>
    %267 = vector.extract_strided_slice %250 {offsets = [0, 64], sizes = [2, 32], strides = [1, 1]} : vector<2x128xf32> to vector<2x32xf32>
    %268 = math.tanh %267 : vector<2x32xf32>
    %269 = vector.extract_strided_slice %250 {offsets = [0, 96], sizes = [2, 32], strides = [1, 1]} : vector<2x128xf32> to vector<2x32xf32>
    %cst_117 = arith.constant 5.000000e-01 : f32
    %270 = vector.broadcast %cst_117 : f32 to vector<2x32xf32>
    %271 = arith.mulf %270, %269 : vector<2x32xf32>
    %272 = math.tanh %271 : vector<2x32xf32>
    %cst_118 = arith.constant 1.000000e+00 : f32
    %273 = vector.broadcast %cst_118 : f32 to vector<2x32xf32>
    %274 = arith.addf %272, %273 : vector<2x32xf32>
    %cst_119 = arith.constant 5.000000e-01 : f32
    %275 = vector.broadcast %cst_119 : f32 to vector<2x32xf32>
    %276 = arith.mulf %275, %274 : vector<2x32xf32>
    %277 = arith.mulf %266, %239 : vector<2x32xf32>
    %278 = arith.mulf %258, %268 : vector<2x32xf32>
    %279 = arith.addf %277, %278 : vector<2x32xf32>
    %280 = math.tanh %279 : vector<2x32xf32>
    %281 = arith.mulf %276, %280 : vector<2x32xf32>
    %c0_120 = arith.constant 0 : index
    %c6_121 = arith.constant 6 : index
    %c0_122 = arith.constant 0 : index
    %282 = vector.load %arg4[%c0_120, %c6_121, %c0_122] : memref<2x8x32xf32, #tpu.memory_space<vmem>>, vector<2x1x32xf32>
    %283 = vector.shape_cast %282 : vector<2x1x32xf32> to vector<2x32xf32>
    %284 = vector.shape_cast %281 : vector<2x32xf32> to vector<2x1x32xf32>
    tpu.vector_store %arg4[%c0_120, %c6_121, %c0_122], %284 {strides = array<i32>} : memref<2x8x32xf32, #tpu.memory_space<vmem>>, vector<2x1x32xf32>,
    %c7 = arith.constant 7 : index
    %c0_123 = arith.constant 0 : index
    %c0_124 = arith.constant 0 : index
    %285 = vector.load %arg2[%c7, %c0_123, %c0_124] : memref<8x2x128xf32, #tpu.memory_space<vmem>>, vector<1x2x128xf32>
    %286 = vector.shape_cast %285 : vector<1x2x128xf32> to vector<2x128xf32>
    %287 = arith.truncf %281 : vector<2x32xf32> to vector<2x32xbf16>
    %c0_125 = arith.constant 0 : index
    %c0_126 = arith.constant 0 : index
    %288 = vector.load %arg3[%c0_125, %c0_126] : memref<32x128xbf16, #tpu.memory_space<vmem>>, vector<32x128xbf16>
    %cst_127 = arith.constant dense<0.000000e+00> : vector<2x128xf32>
    %289 = tpu.matmul %287, %288, %cst_127 {dimension_numbers = #tpu.dot_dimension_numbers<[1], [0], [0], [1], [0, 0, 1, 1], [], []>} : vector<2x32xbf16>, vector<32x128xbf16>, vector<2x128xf32> -> vector<2x128xf32>
    %290 = arith.addf %286, %289 : vector<2x128xf32>
    %291 = vector.extract_strided_slice %290 {offsets = [0, 0], sizes = [2, 32], strides = [1, 1]} : vector<2x128xf32> to vector<2x32xf32>
    %cst_128 = arith.constant 5.000000e-01 : f32
    %292 = vector.broadcast %cst_128 : f32 to vector<2x32xf32>
    %293 = arith.mulf %292, %291 : vector<2x32xf32>
    %294 = math.tanh %293 : vector<2x32xf32>
    %cst_129 = arith.constant 1.000000e+00 : f32
    %295 = vector.broadcast %cst_129 : f32 to vector<2x32xf32>
    %296 = arith.addf %294, %295 : vector<2x32xf32>
    %cst_130 = arith.constant 5.000000e-01 : f32
    %297 = vector.broadcast %cst_130 : f32 to vector<2x32xf32>
    %298 = arith.mulf %297, %296 : vector<2x32xf32>
    %299 = vector.extract_strided_slice %290 {offsets = [0, 32], sizes = [2, 32], strides = [1, 1]} : vector<2x128xf32> to vector<2x32xf32>
    %cst_131 = arith.constant 5.000000e-01 : f32
    %300 = vector.broadcast %cst_131 : f32 to vector<2x32xf32>
    %301 = arith.mulf %300, %299 : vector<2x32xf32>
    %302 = math.tanh %301 : vector<2x32xf32>
    %cst_132 = arith.constant 1.000000e+00 : f32
    %303 = vector.broadcast %cst_132 : f32 to vector<2x32xf32>
    %304 = arith.addf %302, %303 : vector<2x32xf32>
    %cst_133 = arith.constant 5.000000e-01 : f32
    %305 = vector.broadcast %cst_133 : f32 to vector<2x32xf32>
    %306 = arith.mulf %305, %304 : vector<2x32xf32>
    %307 = vector.extract_strided_slice %290 {offsets = [0, 64], sizes = [2, 32], strides = [1, 1]} : vector<2x128xf32> to vector<2x32xf32>
    %308 = math.tanh %307 : vector<2x32xf32>
    %309 = vector.extract_strided_slice %290 {offsets = [0, 96], sizes = [2, 32], strides = [1, 1]} : vector<2x128xf32> to vector<2x32xf32>
    %cst_134 = arith.constant 5.000000e-01 : f32
    %310 = vector.broadcast %cst_134 : f32 to vector<2x32xf32>
    %311 = arith.mulf %310, %309 : vector<2x32xf32>
    %312 = math.tanh %311 : vector<2x32xf32>
    %cst_135 = arith.constant 1.000000e+00 : f32
    %313 = vector.broadcast %cst_135 : f32 to vector<2x32xf32>
    %314 = arith.addf %312, %313 : vector<2x32xf32>
    %cst_136 = arith.constant 5.000000e-01 : f32
    %315 = vector.broadcast %cst_136 : f32 to vector<2x32xf32>
    %316 = arith.mulf %315, %314 : vector<2x32xf32>
    %317 = arith.mulf %306, %279 : vector<2x32xf32>
    %318 = arith.mulf %298, %308 : vector<2x32xf32>
    %319 = arith.addf %317, %318 : vector<2x32xf32>
    %320 = math.tanh %319 : vector<2x32xf32>
    %321 = arith.mulf %316, %320 : vector<2x32xf32>
    %c0_137 = arith.constant 0 : index
    %c7_138 = arith.constant 7 : index
    %c0_139 = arith.constant 0 : index
    %322 = vector.load %arg4[%c0_137, %c7_138, %c0_139] : memref<2x8x32xf32, #tpu.memory_space<vmem>>, vector<2x1x32xf32>
    %323 = vector.shape_cast %322 : vector<2x1x32xf32> to vector<2x32xf32>
    %324 = vector.shape_cast %321 : vector<2x32xf32> to vector<2x1x32xf32>
    tpu.vector_store %arg4[%c0_137, %c7_138, %c0_139], %324 {strides = array<i32>} : memref<2x8x32xf32, #tpu.memory_space<vmem>>, vector<2x1x32xf32>,
    %c0_140 = arith.constant 0 : index
    %c0_141 = arith.constant 0 : index
    %325 = vector.load %arg7[%c0_140, %c0_141] : memref<2x32xf32, #tpu.memory_space<vmem>>, vector<2x32xf32>
    tpu.vector_store %arg7[%c0_140, %c0_141], %321 {strides = array<i32>} : memref<2x32xf32, #tpu.memory_space<vmem>>, vector<2x32xf32>,
    %c0_142 = arith.constant 0 : index
    %c0_143 = arith.constant 0 : index
    %326 = vector.load %arg8[%c0_142, %c0_143] : memref<2x32xf32, #tpu.memory_space<vmem>>, vector<2x32xf32>
    tpu.vector_store %arg8[%c0_142, %c0_143], %319 {strides = array<i32>} : memref<2x32xf32, #tpu.memory_space<vmem>>, vector<2x32xf32>,
    %c0_i32_144 = arith.constant 0 : i32
    %327 = arith.cmpi eq, %arg1, %c0_i32_144 : i32
    %328 = arith.extui %327 : i1 to i32
    %c0_i32_145 = arith.constant 0 : i32
    %329 = arith.cmpi ne, %328, %c0_i32_145 : i32
    scf.if %329 {
      %c0_146 = arith.constant 0 : index
      %c0_147 = arith.constant 0 : index
      %330 = vector.load %arg5[%c0_146, %c0_147] : memref<2x32xf32, #tpu.memory_space<vmem>>, vector<2x32xf32>
      tpu.vector_store %arg5[%c0_146, %c0_147], %321 {strides = array<i32>} : memref<2x32xf32, #tpu.memory_space<vmem>>, vector<2x32xf32>,
      %c0_148 = arith.constant 0 : index
      %c0_149 = arith.constant 0 : index
      %331 = vector.load %arg6[%c0_148, %c0_149] : memref<2x32xf32, #tpu.memory_space<vmem>>, vector<2x32xf32>
      tpu.vector_store %arg6[%c0_148, %c0_149], %319 {strides = array<i32>} : memref<2x32xf32, #tpu.memory_space<vmem>>, vector<2x32xf32>,
    } else {
    }
    return
  }
  func.func @transform_0(%arg0: i32, %arg1: i32) -> (i32, i32, i32) {
    %c0_i32 = arith.constant 0 : i32
    %c0_i32_0 = arith.constant 0 : i32
    return %arg1, %arg0, %c0_i32 : i32, i32, i32
  }
  func.func @transform_1(%arg0: i32, %arg1: i32) -> (i32, i32) {
    %c0_i32 = arith.constant 0 : i32
    %c0_i32_0 = arith.constant 0 : i32
    %c0_i32_1 = arith.constant 0 : i32
    return %c0_i32, %c0_i32_0 : i32, i32
  }
  func.func @transform_2(%arg0: i32, %arg1: i32) -> (i32, i32, i32) {
    %c0_i32 = arith.constant 0 : i32
    %c0_i32_0 = arith.constant 0 : i32
    return %arg0, %arg1, %c0_i32 : i32, i32, i32
  }
  func.func @transform_3(%arg0: i32, %arg1: i32) -> (i32, i32) {
    %c0_i32 = arith.constant 0 : i32
    %c0_i32_0 = arith.constant 0 : i32
    return %arg0, %c0_i32 : i32, i32
  }
  func.func @transform_4(%arg0: i32, %arg1: i32) -> (i32, i32) {
    %c0_i32 = arith.constant 0 : i32
    %c0_i32_0 = arith.constant 0 : i32
    return %arg0, %c0_i32 : i32, i32
  }
}

module attributes {stable_mosaic.version = 11 : i64} {
  func.func @_matmul_bias_kernel(%arg0: i32, %arg1: i32, %arg2: memref<16x32xbf16, #tpu.memory_space<vmem>>, %arg3: memref<32x128xbf16, #tpu.memory_space<vmem>>, %arg4: memref<1x128xf32, #tpu.memory_space<vmem>>, %arg5: memref<16x128xf32, #tpu.memory_space<vmem>>) attributes {dimension_semantics = [#tpu.dimension_semantics<parallel>, #tpu.dimension_semantics<parallel>], iteration_bounds = array<i64: 1, 1>, scalar_prefetch = 0 : i64, scratch_operands = 0 : i64, tpu.core_type = #tpu.core_type<tc>, window_params = [{transform_indices = @transform_0, window_bounds = array<i64: 16, 32>}, {transform_indices = @transform_1, window_bounds = array<i64: 32, 128>}, {transform_indices = @transform_2, window_bounds = array<i64: 1, 128>}, {transform_indices = @transform_3, window_bounds = array<i64: 16, 128>}]} {
    %c0 = arith.constant 0 : index
    %c0_0 = arith.constant 0 : index
    %0 = vector.load %arg2[%c0, %c0_0] : memref<16x32xbf16, #tpu.memory_space<vmem>>, vector<16x32xbf16>
    %c0_1 = arith.constant 0 : index
    %c0_2 = arith.constant 0 : index
    %1 = vector.load %arg3[%c0_1, %c0_2] : memref<32x128xbf16, #tpu.memory_space<vmem>>, vector<32x128xbf16>
    %cst = arith.constant dense<0.000000e+00> : vector<16x128xf32>
    %2 = tpu.matmul %0, %1, %cst {dimension_numbers = #tpu.dot_dimension_numbers<[1], [0], [0], [1], [0, 0, 1, 1], [], []>} : vector<16x32xbf16>, vector<32x128xbf16>, vector<16x128xf32> -> vector<16x128xf32>
    %c0_3 = arith.constant 0 : index
    %c0_4 = arith.constant 0 : index
    %3 = vector.load %arg4[%c0_3, %c0_4] : memref<1x128xf32, #tpu.memory_space<vmem>>, vector<1x128xf32>
    %4 = vector.broadcast %3 : vector<1x128xf32> to vector<16x128xf32>
    %5 = arith.addf %2, %4 : vector<16x128xf32>
    %c0_5 = arith.constant 0 : index
    %c0_6 = arith.constant 0 : index
    %6 = vector.load %arg5[%c0_5, %c0_6] : memref<16x128xf32, #tpu.memory_space<vmem>>, vector<16x128xf32>
    tpu.vector_store %arg5[%c0_5, %c0_6], %5 {strides = array<i32>} : memref<16x128xf32, #tpu.memory_space<vmem>>, vector<16x128xf32>,
    return
  }
  func.func @transform_0(%arg0: i32, %arg1: i32) -> (i32, i32) {
    %c0_i32 = arith.constant 0 : i32
    %c0_i32_0 = arith.constant 0 : i32
    return %arg0, %c0_i32 : i32, i32
  }
  func.func @transform_1(%arg0: i32, %arg1: i32) -> (i32, i32) {
    %c0_i32 = arith.constant 0 : i32
    %c0_i32_0 = arith.constant 0 : i32
    return %c0_i32, %arg1 : i32, i32
  }
  func.func @transform_2(%arg0: i32, %arg1: i32) -> (i32, i32) {
    %c0_i32 = arith.constant 0 : i32
    %c0_i32_0 = arith.constant 0 : i32
    return %c0_i32, %arg1 : i32, i32
  }
  func.func @transform_3(%arg0: i32, %arg1: i32) -> (i32, i32) {
    %c0_i32 = arith.constant 0 : i32
    return %arg0, %arg1 : i32, i32
  }
}

</mosaic_0001>

<llo_original>
// kernel: rnn_forward.7
$region0: #{rnn_forward.7}
  #allocation0 [shape = 'u32[]', space=smem, size = 0x4, offset = 0x4, fixed_abs, tag = 'smem constant byte address 0x4 - core index']
  #allocation1 [shape = 'u32[72,128]{1,0:T(1,128)}', space=vmem, size = 0x9000, scoped, tag = 'internal scratch']
  %s0 = inlined_call_operand.vmem [shape: bf16[16,32], index: 0, kind: input, shape index: {}]
  %s1 = inlined_call_operand.vmem [shape: bf16[32,128], index: 1, kind: input, shape index: {}]
  %s2 = inlined_call_operand.vmem [shape: f32[1,128], index: 2, kind: input, shape index: {}]
  %s3 = inlined_call_operand.vmem [shape: f32[16,128], index: 3, kind: output, shape index: {}]
  %s4 = sld [smem:[#allocation0]]
  $region22: #{rnn_forward.7} parent=0
    _
  %s6 = ssub.s32 1, %s4
  %s7 = scalar_select 0, %s6, %s4
  // Predicated region
  $region2: #{rnn_forward.7} parent=0 // pred_check
    _
  $region3: #{rnn_forward.7} parent=0 // pred_check_branch
    %9 = sbr.rel (0) target = $region5
  $region4: #{rnn_forward.7} parent=0 // pred_region
    _
  $region5: #{rnn_forward.7} parent=0 // pred_fallthru
    _
  // Predicated region
  $region6: #{rnn_forward.7} parent=0 // pred_check
    _
  $region7: #{rnn_forward.7} parent=0 // pred_check_branch
    %11 = sbr.rel (0) target = $region9
  $region8: #{rnn_forward.7} parent=0 // pred_region
    _
  $region9: #{rnn_forward.7} parent=0 // pred_fallthru
    _
  // Predicated region
  $region10: #{rnn_forward.7} parent=0 // pred_check
    _
  $region11: #{rnn_forward.7} parent=0 // pred_check_branch
    %13 = sbr.rel (0) target = $region13
  $region12: #{rnn_forward.7} parent=0 // pred_region
    _
  $region13: #{rnn_forward.7} parent=0 // pred_fallthru
    _
  %v15 = vld [vmem:[%s0] sm:$0xf]
  %v16 = vld [vmem:[%s0 + $0x4] sm:$0xf]
  %v17 = vld [vmem:[%s1] sm:$0xf]
  %v18 = vld [vmem:[%s1 + $0x4] sm:$0xf]
  %v19 = vld [vmem:[%s1 + $0x8] sm:$0xf]
  %v20 = vld [vmem:[%s1 + $0xc] sm:$0xf]
  %v21 = vld [vmem:[%s2] sm:$0x1]
  %v23 = vperm.slane %v21, 0
  %v27 = vunpack.c.l.b16 %v15
  %v28 = vunpack.c.l.b16 %v16
  %v29 = vpack.c.b16 %v28, %v27
  %v34 = vunpack.c.l.b16 %v17
  %v35 = vunpack.c.l.b16 %v18
  %v36 = vunpack.c.l.b16 %v19
  %v37 = vunpack.c.l.b16 %v20
  %v38 = vpack.c.b16 %v35, %v34
  %v39 = vpack.c.b16 %v37, %v36
  %vm42 = vcmask 261120
  %v44 = vsel %vm42, %v29, 0
  %46 = vmatpush.bf16.msra.mxu0 0
  %47 = vmatpush.bf16.msra.mxu0 0
  %48 = vmatpush.bf16.msra.mxu0 0
  %49 = vmatpush.bf16.msra.mxu0 0
  %50 = vmatpush.bf16.msra.mxu0 0
  %51 = vmatpush.bf16.msra.mxu0 0
  %52 = vmatpush.bf16.msra.mxu0 %v39
  %53 = vmatpush.bf16.msra.mxu0 %v38
  %54 = vmatmul.bf16.gmra.mxu0 %v44
  %v55 = vpop.f32.mrf.mxu0
  %v56 = vadd.f32 %v23, %v55
  %v57 = vpop.f32.mrf.mxu0
  %v58 = vadd.f32 %v23, %v57
  %59 = vdwg.mxu0
  %60 = vst [vmem:[%s3] sm:$0xff] %v56
  %61 = vst [vmem:[%s3 + $0x8] sm:$0xff] %v58
  // Predicated region
  $region14: #{rnn_forward.7} parent=0 // pred_check
    _
  $region15: #{rnn_forward.7} parent=0 // pred_check_branch
    %63 = sbr.rel (0) target = $region17
  $region16: #{rnn_forward.7} parent=0 // pred_region
    _
  $region17: #{rnn_forward.7} parent=0 // pred_fallthru
    _
  // Predicated region
  $region18: #{rnn_forward.7} parent=0 // pred_check
    _
  $region19: #{rnn_forward.7} parent=0 // pred_check_branch
    %65 = sbr.rel (0) target = $region21
  $region20: #{rnn_forward.7} parent=0 // pred_region
    _
  $region21: #{rnn_forward.7} parent=0 // pred_fallthru
    _

// kernel: rnn_forward.5
$region0: #{rnn_forward.5}
  #allocation0 [shape = 'u32[]', space=smem, size = 0x4, offset = 0x4, fixed_abs, tag = 'smem constant byte address 0x4 - core index']
  #allocation1 [shape = 'u32[72,128]{1,0:T(1,128)}', space=vmem, size = 0x9000, scoped, tag = 'internal scratch']
  %s0 = inlined_call_operand.vmem [shape: bf16[16,16], index: 0, kind: input, shape index: {}]
  %s1 = inlined_call_operand.vmem [shape: bf16[16,128], index: 1, kind: input, shape index: {}]
  %s2 = inlined_call_operand.vmem [shape: f32[1,128], index: 2, kind: input, shape index: {}]
  %s3 = inlined_call_operand.vmem [shape: f32[16,128], index: 3, kind: output, shape index: {}]
  %s4 = sld [smem:[#allocation0]]
  $region22: #{rnn_forward.5} parent=0
    _
  %s6 = ssub.s32 1, %s4
  %s7 = scalar_select 0, %s6, %s4
  // Predicated region
  $region2: #{rnn_forward.5} parent=0 // pred_check
    _
  $region3: #{rnn_forward.5} parent=0 // pred_check_branch
    %9 = sbr.rel (0) target = $region5
  $region4: #{rnn_forward.5} parent=0 // pred_region
    _
  $region5: #{rnn_forward.5} parent=0 // pred_fallthru
    _
  // Predicated region
  $region6: #{rnn_forward.5} parent=0 // pred_check
    _
  $region7: #{rnn_forward.5} parent=0 // pred_check_branch
    %11 = sbr.rel (0) target = $region9
  $region8: #{rnn_forward.5} parent=0 // pred_region
    _
  $region9: #{rnn_forward.5} parent=0 // pred_fallthru
    _
  // Predicated region
  $region10: #{rnn_forward.5} parent=0 // pred_check
    _
  $region11: #{rnn_forward.5} parent=0 // pred_check_branch
    %13 = sbr.rel (0) target = $region13
  $region12: #{rnn_forward.5} parent=0 // pred_region
    _
  $region13: #{rnn_forward.5} parent=0 // pred_fallthru
    _
  %v15 = vld [vmem:[%s0] sm:$0xf]
  %v16 = vld [vmem:[%s0 + $0x4] sm:$0xf]
  %v17 = vld [vmem:[%s1] sm:$0xf]
  %v18 = vld [vmem:[%s1 + $0x4] sm:$0xf]
  %v19 = vld [vmem:[%s2] sm:$0x1]
  %v21 = vperm.slane %v19, 0
  %v25 = vunpack.c.l.b16 %v15
  %v26 = vunpack.c.l.b16 %v16
  %v27 = vpack.c.b16 %v26, %v25
  %v30 = vunpack.c.l.b16 %v17
  %v31 = vunpack.c.l.b16 %v18
  %v32 = vpack.c.b16 %v31, %v30
  %vm34 = vcmask 130048
  %v36 = vsel %vm34, %v27, 0
  %38 = vmatpush.bf16.msra.mxu0 0
  %39 = vmatpush.bf16.msra.mxu0 0
  %40 = vmatpush.bf16.msra.mxu0 0
  %41 = vmatpush.bf16.msra.mxu0 0
  %42 = vmatpush.bf16.msra.mxu0 0
  %43 = vmatpush.bf16.msra.mxu0 0
  %44 = vmatpush.bf16.msra.mxu0 0
  %45 = vmatpush.bf16.msra.mxu0 %v32
  %46 = vmatmul.bf16.gmra.mxu0 %v36
  %v47 = vpop.f32.mrf.mxu0
  %v48 = vadd.f32 %v21, %v47
  %v49 = vpop.f32.mrf.mxu0
  %v50 = vadd.f32 %v21, %v49
  %51 = vdwg.mxu0
  %52 = vst [vmem:[%s3] sm:$0xff] %v48
  %53 = vst [vmem:[%s3 + $0x8] sm:$0xff] %v50
  // Predicated region
  $region14: #{rnn_forward.5} parent=0 // pred_check
    _
  $region15: #{rnn_forward.5} parent=0 // pred_check_branch
    %55 = sbr.rel (0) target = $region17
  $region16: #{rnn_forward.5} parent=0 // pred_region
    _
  $region17: #{rnn_forward.5} parent=0 // pred_fallthru
    _
  // Predicated region
  $region18: #{rnn_forward.5} parent=0 // pred_check
    _
  $region19: #{rnn_forward.5} parent=0 // pred_check_branch
    %57 = sbr.rel (0) target = $region21
  $region20: #{rnn_forward.5} parent=0 // pred_region
    _
  $region21: #{rnn_forward.5} parent=0 // pred_fallthru
    _

// kernel: rnn_forward.8
$region0: #{rnn_forward.8}
  #allocation0 [shape = 'u32[]', space=smem, size = 0x4, offset = 0x4, fixed_abs, tag = 'smem constant byte address 0x4 - core index']
  #allocation1 [shape = 'u32[72,128]{1,0:T(1,128)}', space=vmem, size = 0x9000, scoped, tag = 'internal scratch']
  #allocation2 [shape = 'f32[2,32]{1,0:T(2,128)}', space=vmem, size = 0x400, scoped, tag = 'scratch operand']
  #allocation3 [shape = 'f32[2,32]{1,0:T(2,128)}', space=vmem, size = 0x400, scoped, tag = 'scratch operand']
  %s0 = inlined_call_operand.vmem [shape: f32[8,2,128], index: 0, kind: input, shape index: {}]
  %s1 = inlined_call_operand.vmem [shape: bf16[32,128], index: 1, kind: input, shape index: {}]
  %s2 = inlined_call_operand.vmem [shape: f32[2,8,32], index: 2, kind: output, shape index: {0}]
  %s3 = inlined_call_operand.vmem [shape: f32[2,32], index: 3, kind: output, shape index: {1}]
  %s4 = inlined_call_operand.vmem [shape: f32[2,32], index: 4, kind: output, shape index: {2}]
  %5 = xla_tuple %s2, %s3, %s4
  %s6 = sld [smem:[#allocation0]]
  $region42: #{rnn_forward.8} parent=0
    _
  %s8 = ssub.s32 1, %s6
  %s9 = scalar_select 0, %s8, %s6
  // Predicated region
  $region2: #{rnn_forward.8} parent=0 // pred_check
    _
  $region3: #{rnn_forward.8} parent=0 // pred_check_branch
    %11 = sbr.rel (0) target = $region5
  $region4: #{rnn_forward.8} parent=0 // pred_region
    _
  $region5: #{rnn_forward.8} parent=0 // pred_fallthru
    _
  // Predicated region
  $region6: #{rnn_forward.8} parent=0 // pred_check
    _
  $region7: #{rnn_forward.8} parent=0 // pred_check_branch
    %13 = sbr.rel (0) target = $region9
  $region8: #{rnn_forward.8} parent=0 // pred_region
    _
  $region9: #{rnn_forward.8} parent=0 // pred_fallthru
    _
  %p15 = scmp.eq.s32.totalorder 0, 0
  // Predicated region
  $region10: #{rnn_forward.8} parent=0 // pred_check
    %p16 = pneg %p15
  $region11: #{rnn_forward.8} parent=0 // pred_check_branch
    %18 = sbr.rel (%p16) target = $region13
  $region12: #{rnn_forward.8} parent=0 // pred_region
    %vm19 = vcmask 254976
    %20 = vst.msk [vmem:[#allocation2] sm:$0x3] %vm19, 0.0
    %21 = vst.msk [vmem:[#allocation3] sm:$0x3] %vm19, 0.0
  $region13: #{rnn_forward.8} parent=0 // pred_fallthru
    _
  %v22 = vld [vmem:[#allocation2] sm:$0x3]
  %v23 = vld [vmem:[#allocation3] sm:$0x3]
  %v24 = vld [vmem:[%s0] sm:$0x3]
  %v25 = vpack.c.bf16 %v22, %v22
  %v26 = vld [vmem:[%s1] sm:$0xf]
  %v27 = vld [vmem:[%s1 + $0x4] sm:$0xf]
  %v28 = vld [vmem:[%s1 + $0x8] sm:$0xf]
  %v29 = vld [vmem:[%s1 + $0xc] sm:$0xf]
  %v34 = vunpack.c.l.b16 %v26
  %v35 = vunpack.c.l.b16 %v27
  %v36 = vunpack.c.l.b16 %v28
  %v37 = vunpack.c.l.b16 %v29
  %v38 = vpack.c.b16 %v35, %v34
  %v39 = vpack.c.b16 %v37, %v36
  %vm42 = vcmask 261120
  %v44 = vsel %vm42, %v25, 0
  %46 = vmatpush.bf16.msra.mxu0 0
  %47 = vmatpush.bf16.msra.mxu0 0
  %48 = vmatpush.bf16.msra.mxu0 0
  %49 = vmatpush.bf16.msra.mxu0 0
  %50 = vmatpush.bf16.msra.mxu0 0
  %51 = vmatpush.bf16.msra.mxu0 0
  %52 = vmatpush.bf16.msra.mxu0 %v39
  %53 = vmatpush.bf16.msra.mxu0 %v38
  %54 = vmatmul.bf16.gmra.mxu0 %v44
  %v55 = vpop.f32.mrf.mxu0
  %v56 = vadd.f32 0.0, %v55
  %v57 = vpop.f32.mrf.mxu0
  %58 = vdwg.mxu0
  %v59 = vadd.f32 %v24, %v56
  %v60 = vmul.f32 %v59, 0.5
  %v61 = vtanh.pop %v60
  %v62 = vadd.f32 %v61, 1.0
  %v63 = vmul.f32 %v62, 0.5
  %v64 = vtanh.pop %v59
  %66 = vrot.lane.b32.xlu0 %v23, 32
  %v67 = vpop.permute.xlu0 %66
  %v69 = vmul.f32 %v63, %v67
  %71 = vrot.lane.b32.xlu0 %v64, 64
  %v72 = vpop.permute.xlu0 %71
  %v74 = vmul.f32 %v63, %v72
  %76 = vrot.lane.b32.xlu0 %v74, 32
  %v77 = vpop.permute.xlu0 %76
  %v79 = vadd.f32 %v69, %v77
  %v80 = vtanh.pop %v79
  %82 = vrot.lane.b32.xlu0 %v80, 64
  %v83 = vpop.permute.xlu0 %82
  %v85 = vmul.f32 %v63, %v83
  %v87 = vrot.slane %v85, 1
  %v88 = vperm.slane %v85, 0
  %v89 = vperm.slane %v87, 0
  %90 = vrot.lane.b32.xlu0 %v88, 32
  %v91 = vpop.permute.xlu0 %90
  %92 = vrot.lane.b32.xlu0 %v89, 32
  %v93 = vpop.permute.xlu0 %92
  %vm96 = vcmask 253952
  %97 = vst.msk [vmem:[%s2] sm:$0x1] %vm96, %v91
  %98 = vst.msk [vmem:[%s2 + $0x8] sm:$0x1] %vm96, %v93
  %s99 = scalar_lea.vmem %s0, 2
  %v100 = vld [vmem:[%s99] sm:$0x3]
  %v101 = vpack.c.bf16 %v85, %v85
  %v102 = vld [vmem:[%s1] sm:$0xf]
  %v103 = vld [vmem:[%s1 + $0x4] sm:$0xf]
  %v104 = vld [vmem:[%s1 + $0x8] sm:$0xf]
  %v105 = vld [vmem:[%s1 + $0xc] sm:$0xf]
  %107 = vrot.lane.b32.xlu0 %v101, 32
  %v108 = vpop.permute.xlu0 %107
  %v113 = vunpack.c.l.b16 %v102
  %v114 = vunpack.c.l.b16 %v103
  %v115 = vunpack.c.l.b16 %v104
  %v116 = vunpack.c.l.b16 %v105
  %v117 = vpack.c.b16 %v114, %v113
  %v118 = vpack.c.b16 %v116, %v115
  %v122 = vsel %vm42, %v108, 0
  %124 = vmatpush.bf16.msra.mxu0 0
  %125 = vmatpush.bf16.msra.mxu0 0
  %126 = vmatpush.bf16.msra.mxu0 0
  %127 = vmatpush.bf16.msra.mxu0 0
  %128 = vmatpush.bf16.msra.mxu0 0
  %129 = vmatpush.bf16.msra.mxu0 0
  %130 = vmatpush.bf16.msra.mxu0 %v118
  %131 = vmatpush.bf16.msra.mxu0 %v117
  %132 = vmatmul.bf16.gmra.mxu0 %v122
  %v133 = vpop.f32.mrf.mxu0
  %v134 = vadd.f32 0.0, %v133
  %v135 = vpop.f32.mrf.mxu0
  %136 = vdwg.mxu0
  %v137 = vadd.f32 %v100, %v134
  %v138 = vmul.f32 %v137, 0.5
  %v139 = vtanh.pop %v138
  %v140 = vadd.f32 %v139, 1.0
  %v141 = vmul.f32 %v140, 0.5
  %v142 = vtanh.pop %v137
  %v143 = vmul.f32 %v141, %v79
  %145 = vrot.lane.b32.xlu0 %v142, 64
  %v146 = vpop.permute.xlu0 %145
  %v148 = vmul.f32 %v141, %v146
  %150 = vrot.lane.b32.xlu0 %v148, 32
  %v151 = vpop.permute.xlu0 %150
  %v153 = vadd.f32 %v143, %v151
  %v154 = vtanh.pop %v153
  %156 = vrot.lane.b32.xlu0 %v154, 64
  %v157 = vpop.permute.xlu0 %156
  %v159 = vmul.f32 %v141, %v157
  %v161 = vrot.slane %v159, 1
  %v162 = vperm.slane %v159, 0
  %v163 = vperm.slane %v161, 0
  %164 = vrot.lane.b32.xlu0 %v162, 32
  %v165 = vpop.permute.xlu0 %164
  %166 = vrot.lane.b32.xlu0 %v163, 32
  %v167 = vpop.permute.xlu0 %166
  %170 = vst.msk [vmem:[%s2 + $0x1] sm:$0x1] %vm96, %v165
  %171 = vst.msk [vmem:[%s2 + $0x9] sm:$0x1] %vm96, %v167
  %s172 = scalar_lea.vmem %s0, 4
  %v173 = vld [vmem:[%s172] sm:$0x3]
  %v174 = vpack.c.bf16 %v159, %v159
  %v175 = vld [vmem:[%s1] sm:$0xf]
  %v176 = vld [vmem:[%s1 + $0x4] sm:$0xf]
  %v177 = vld [vmem:[%s1 + $0x8] sm:$0xf]
  %v178 = vld [vmem:[%s1 + $0xc] sm:$0xf]
  %180 = vrot.lane.b32.xlu0 %v174, 32
  %v181 = vpop.permute.xlu0 %180
  %v186 = vunpack.c.l.b16 %v175
  %v187 = vunpack.c.l.b16 %v176
  %v188 = vunpack.c.l.b16 %v177
  %v189 = vunpack.c.l.b16 %v178
  %v190 = vpack.c.b16 %v187, %v186
  %v191 = vpack.c.b16 %v189, %v188
  %v195 = vsel %vm42, %v181, 0
  %197 = vmatpush.bf16.msra.mxu0 0
  %198 = vmatpush.bf16.msra.mxu0 0
  %199 = vmatpush.bf16.msra.mxu0 0
  %200 = vmatpush.bf16.msra.mxu0 0
  %201 = vmatpush.bf16.msra.mxu0 0
  %202 = vmatpush.bf16.msra.mxu0 0
  %203 = vmatpush.bf16.msra.mxu0 %v191
  %204 = vmatpush.bf16.msra.mxu0 %v190
  %205 = vmatmul.bf16.gmra.mxu0 %v195
  %v206 = vpop.f32.mrf.mxu0
  %v207 = vadd.f32 0.0, %v206
  %v208 = vpop.f32.mrf.mxu0
  %209 = vdwg.mxu0
  %v210 = vadd.f32 %v173, %v207
  %v211 = vmul.f32 %v210, 0.5
  %v212 = vtanh.pop %v211
  %v213 = vadd.f32 %v212, 1.0
  %v214 = vmul.f32 %v213, 0.5
  %v215 = vtanh.pop %v210
  %v216 = vmul.f32 %v214, %v153
  %218 = vrot.lane.b32.xlu0 %v215, 64
  %v219 = vpop.permute.xlu0 %218
  %v221 = vmul.f32 %v214, %v219
  %223 = vrot.lane.b32.xlu0 %v221, 32
  %v224 = vpop.permute.xlu0 %223
  %v226 = vadd.f32 %v216, %v224
  %v227 = vtanh.pop %v226
  %229 = vrot.lane.b32.xlu0 %v227, 64
  %v230 = vpop.permute.xlu0 %229
  %v232 = vmul.f32 %v214, %v230
  %v234 = vrot.slane %v232, 1
  %v235 = vperm.slane %v232, 0
  %v236 = vperm.slane %v234, 0
  %237 = vrot.lane.b32.xlu0 %v235, 32
  %v238 = vpop.permute.xlu0 %237
  %239 = vrot.lane.b32.xlu0 %v236, 32
  %v240 = vpop.permute.xlu0 %239
  %243 = vst.msk [vmem:[%s2 + $0x2] sm:$0x1] %vm96, %v238
  %244 = vst.msk [vmem:[%s2 + $0xa] sm:$0x1] %vm96, %v240
  %s245 = scalar_lea.vmem %s0, 6
  %v246 = vld [vmem:[%s245] sm:$0x3]
  %v247 = vpack.c.bf16 %v232, %v232
  %v248 = vld [vmem:[%s1] sm:$0xf]
  %v249 = vld [vmem:[%s1 + $0x4] sm:$0xf]
  %v250 = vld [vmem:[%s1 + $0x8] sm:$0xf]
  %v251 = vld [vmem:[%s1 + $0xc] sm:$0xf]
  %253 = vrot.lane.b32.xlu0 %v247, 32
  %v254 = vpop.permute.xlu0 %253
  %v259 = vunpack.c.l.b16 %v248
  %v260 = vunpack.c.l.b16 %v249
  %v261 = vunpack.c.l.b16 %v250
  %v262 = vunpack.c.l.b16 %v251
  %v263 = vpack.c.b16 %v260, %v259
  %v264 = vpack.c.b16 %v262, %v261
  %v268 = vsel %vm42, %v254, 0
  %270 = vmatpush.bf16.msra.mxu0 0
  %271 = vmatpush.bf16.msra.mxu0 0
  %272 = vmatpush.bf16.msra.mxu0 0
  %273 = vmatpush.bf16.msra.mxu0 0
  %274 = vmatpush.bf16.msra.mxu0 0
  %275 = vmatpush.bf16.msra.mxu0 0
  %276 = vmatpush.bf16.msra.mxu0 %v264
  %277 = vmatpush.bf16.msra.mxu0 %v263
  %278 = vmatmul.bf16.gmra.mxu0 %v268
  %v279 = vpop.f32.mrf.mxu0
  %v280 = vadd.f32 0.0, %v279
  %v281 = vpop.f32.mrf.mxu0
  %282 = vdwg.mxu0
  %v283 = vadd.f32 %v246, %v280
  %v284 = vmul.f32 %v283, 0.5
  %v285 = vtanh.pop %v284
  %v286 = vadd.f32 %v285, 1.0
  %v287 = vmul.f32 %v286, 0.5
  %v288 = vtanh.pop %v283
  %v289 = vmul.f32 %v287, %v226
  %291 = vrot.lane.b32.xlu0 %v288, 64
  %v292 = vpop.permute.xlu0 %291
  %v294 = vmul.f32 %v287, %v292
  %296 = vrot.lane.b32.xlu0 %v294, 32
  %v297 = vpop.permute.xlu0 %296
  %v299 = vadd.f32 %v289, %v297
  %v300 = vtanh.pop %v299
  %302 = vrot.lane.b32.xlu0 %v300, 64
  %v303 = vpop.permute.xlu0 %302
  %v305 = vmul.f32 %v287, %v303
  %v307 = vrot.slane %v305, 1
  %v308 = vperm.slane %v305, 0
  %v309 = vperm.slane %v307, 0
  %310 = vrot.lane.b32.xlu0 %v308, 32
  %v311 = vpop.permute.xlu0 %310
  %312 = vrot.lane.b32.xlu0 %v309, 32
  %v313 = vpop.permute.xlu0 %312
  %316 = vst.msk [vmem:[%s2 + $0x3] sm:$0x1] %vm96, %v311
  %317 = vst.msk [vmem:[%s2 + $0xb] sm:$0x1] %vm96, %v313
  %s318 = scalar_lea.vmem %s0, 8
  %v319 = vld [vmem:[%s318] sm:$0x3]
  %v320 = vpack.c.bf16 %v305, %v305
  %v321 = vld [vmem:[%s1] sm:$0xf]
  %v322 = vld [vmem:[%s1 + $0x4] sm:$0xf]
  %v323 = vld [vmem:[%s1 + $0x8] sm:$0xf]
  %v324 = vld [vmem:[%s1 + $0xc] sm:$0xf]
  %326 = vrot.lane.b32.xlu0 %v320, 32
  %v327 = vpop.permute.xlu0 %326
  %v332 = vunpack.c.l.b16 %v321
  %v333 = vunpack.c.l.b16 %v322
  %v334 = vunpack.c.l.b16 %v323
  %v335 = vunpack.c.l.b16 %v324
  %v336 = vpack.c.b16 %v333, %v332
  %v337 = vpack.c.b16 %v335, %v334
  %v341 = vsel %vm42, %v327, 0
  %343 = vmatpush.bf16.msra.mxu0 0
  %344 = vmatpush.bf16.msra.mxu0 0
  %345 = vmatpush.bf16.msra.mxu0 0
  %346 = vmatpush.bf16.msra.mxu0 0
  %347 = vmatpush.bf16.msra.mxu0 0
  %348 = vmatpush.bf16.msra.mxu0 0
  %349 = vmatpush.bf16.msra.mxu0 %v337
  %350 = vmatpush.bf16.msra.mxu0 %v336
  %351 = vmatmul.bf16.gmra.mxu0 %v341
  %v352 = vpop.f32.mrf.mxu0
  %v353 = vadd.f32 0.0, %v352
  %v354 = vpop.f32.mrf.mxu0
  %355 = vdwg.mxu0
  %v356 = vadd.f32 %v319, %v353
  %v357 = vmul.f32 %v356, 0.5
  %v358 = vtanh.pop %v357
  %v359 = vadd.f32 %v358, 1.0
  %v360 = vmul.f32 %v359, 0.5
  %v361 = vtanh.pop %v356
  %v362 = vmul.f32 %v360, %v299
  %364 = vrot.lane.b32.xlu0 %v361, 64
  %v365 = vpop.permute.xlu0 %364
  %v367 = vmul.f32 %v360, %v365
  %369 = vrot.lane.b32.xlu0 %v367, 32
  %v370 = vpop.permute.xlu0 %369
  %v372 = vadd.f32 %v362, %v370
  %v373 = vtanh.pop %v372
  %375 = vrot.lane.b32.xlu0 %v373, 64
  %v376 = vpop.permute.xlu0 %375
  %v378 = vmul.f32 %v360, %v376
  %v380 = vrot.slane %v378, 1
  %v381 = vperm.slane %v378, 0
  %v382 = vperm.slane %v380, 0
  %383 = vrot.lane.b32.xlu0 %v381, 32
  %v384 = vpop.permute.xlu0 %383
  %385 = vrot.lane.b32.xlu0 %v382, 32
  %v386 = vpop.permute.xlu0 %385
  %389 = vst.msk [vmem:[%s2 + $0x4] sm:$0x1] %vm96, %v384
  %390 = vst.msk [vmem:[%s2 + $0xc] sm:$0x1] %vm96, %v386
  %s391 = scalar_lea.vmem %s0, 10
  %v392 = vld [vmem:[%s391] sm:$0x3]
  %v393 = vpack.c.bf16 %v378, %v378
  %v394 = vld [vmem:[%s1] sm:$0xf]
  %v395 = vld [vmem:[%s1 + $0x4] sm:$0xf]
  %v396 = vld [vmem:[%s1 + $0x8] sm:$0xf]
  %v397 = vld [vmem:[%s1 + $0xc] sm:$0xf]
  %399 = vrot.lane.b32.xlu0 %v393, 32
  %v400 = vpop.permute.xlu0 %399
  %v405 = vunpack.c.l.b16 %v394
  %v406 = vunpack.c.l.b16 %v395
  %v407 = vunpack.c.l.b16 %v396
  %v408 = vunpack.c.l.b16 %v397
  %v409 = vpack.c.b16 %v406, %v405
  %v410 = vpack.c.b16 %v408, %v407
  %v414 = vsel %vm42, %v400, 0
  %416 = vmatpush.bf16.msra.mxu0 0
  %417 = vmatpush.bf16.msra.mxu0 0
  %418 = vmatpush.bf16.msra.mxu0 0
  %419 = vmatpush.bf16.msra.mxu0 0
  %420 = vmatpush.bf16.msra.mxu0 0
  %421 = vmatpush.bf16.msra.mxu0 0
  %422 = vmatpush.bf16.msra.mxu0 %v410
  %423 = vmatpush.bf16.msra.mxu0 %v409
  %424 = vmatmul.bf16.gmra.mxu0 %v414
  %v425 = vpop.f32.mrf.mxu0
  %v426 = vadd.f32 0.0, %v425
  %v427 = vpop.f32.mrf.mxu0
  %428 = vdwg.mxu0
  %v429 = vadd.f32 %v392, %v426
  %v430 = vmul.f32 %v429, 0.5
  %v431 = vtanh.pop %v430
  %v432 = vadd.f32 %v431, 1.0
  %v433 = vmul.f32 %v432, 0.5
  %v434 = vtanh.pop %v429
  %v435 = vmul.f32 %v433, %v372
  %437 = vrot.lane.b32.xlu0 %v434, 64
  %v438 = vpop.permute.xlu0 %437
  %v440 = vmul.f32 %v433, %v438
  %442 = vrot.lane.b32.xlu0 %v440, 32
  %v443 = vpop.permute.xlu0 %442
  %v445 = vadd.f32 %v435, %v443
  %v446 = vtanh.pop %v445
  %448 = vrot.lane.b32.xlu0 %v446, 64
  %v449 = vpop.permute.xlu0 %448
  %v451 = vmul.f32 %v433, %v449
  %v453 = vrot.slane %v451, 1
  %v454 = vperm.slane %v451, 0
  %v455 = vperm.slane %v453, 0
  %456 = vrot.lane.b32.xlu0 %v454, 32
  %v457 = vpop.permute.xlu0 %456
  %458 = vrot.lane.b32.xlu0 %v455, 32
  %v459 = vpop.permute.xlu0 %458
  %462 = vst.msk [vmem:[%s2 + $0x5] sm:$0x1] %vm96, %v457
  %463 = vst.msk [vmem:[%s2 + $0xd] sm:$0x1] %vm96, %v459
  %s464 = scalar_lea.vmem %s0, 12
  %v465 = vld [vmem:[%s464] sm:$0x3]
  %v466 = vpack.c.bf16 %v451, %v451
  %v467 = vld [vmem:[%s1] sm:$0xf]
  %v468 = vld [vmem:[%s1 + $0x4] sm:$0xf]
  %v469 = vld [vmem:[%s1 + $0x8] sm:$0xf]
  %v470 = vld [vmem:[%s1 + $0xc] sm:$0xf]
  %472 = vrot.lane.b32.xlu0 %v466, 32
  %v473 = vpop.permute.xlu0 %472
  %v478 = vunpack.c.l.b16 %v467
  %v479 = vunpack.c.l.b16 %v468
  %v480 = vunpack.c.l.b16 %v469
  %v481 = vunpack.c.l.b16 %v470
  %v482 = vpack.c.b16 %v479, %v478
  %v483 = vpack.c.b16 %v481, %v480
  %v487 = vsel %vm42, %v473, 0
  %489 = vmatpush.bf16.msra.mxu0 0
  %490 = vmatpush.bf16.msra.mxu0 0
  %491 = vmatpush.bf16.msra.mxu0 0
  %492 = vmatpush.bf16.msra.mxu0 0
  %493 = vmatpush.bf16.msra.mxu0 0
  %494 = vmatpush.bf16.msra.mxu0 0
  %495 = vmatpush.bf16.msra.mxu0 %v483
  %496 = vmatpush.bf16.msra.mxu0 %v482
  %497 = vmatmul.bf16.gmra.mxu0 %v487
  %v498 = vpop.f32.mrf.mxu0
  %v499 = vadd.f32 0.0, %v498
  %v500 = vpop.f32.mrf.mxu0
  %501 = vdwg.mxu0
  %v502 = vadd.f32 %v465, %v499
  %v503 = vmul.f32 %v502, 0.5
  %v504 = vtanh.pop %v503
  %v505 = vadd.f32 %v504, 1.0
  %v506 = vmul.f32 %v505, 0.5
  %v507 = vtanh.pop %v502
  %v508 = vmul.f32 %v506, %v445
  %510 = vrot.lane.b32.xlu0 %v507, 64
  %v511 = vpop.permute.xlu0 %510
  %v513 = vmul.f32 %v506, %v511
  %515 = vrot.lane.b32.xlu0 %v513, 32
  %v516 = vpop.permute.xlu0 %515
  %v518 = vadd.f32 %v508, %v516
  %v519 = vtanh.pop %v518
  %521 = vrot.lane.b32.xlu0 %v519, 64
  %v522 = vpop.permute.xlu0 %521
  %v524 = vmul.f32 %v506, %v522
  %v526 = vrot.slane %v524, 1
  %v527 = vperm.slane %v524, 0
  %v528 = vperm.slane %v526, 0
  %529 = vrot.lane.b32.xlu0 %v527, 32
  %v530 = vpop.permute.xlu0 %529
  %531 = vrot.lane.b32.xlu0 %v528, 32
  %v532 = vpop.permute.xlu0 %531
  %535 = vst.msk [vmem:[%s2 + $0x6] sm:$0x1] %vm96, %v530
  %536 = vst.msk [vmem:[%s2 + $0xe] sm:$0x1] %vm96, %v532
  %s537 = scalar_lea.vmem %s0, 14
  %v538 = vld [vmem:[%s537] sm:$0x3]
  %v539 = vpack.c.bf16 %v524, %v524
  %v540 = vld [vmem:[%s1] sm:$0xf]
  %v541 = vld [vmem:[%s1 + $0x4] sm:$0xf]
  %v542 = vld [vmem:[%s1 + $0x8] sm:$0xf]
  %v543 = vld [vmem:[%s1 + $0xc] sm:$0xf]
  %545 = vrot.lane.b32.xlu0 %v539, 32
  %v546 = vpop.permute.xlu0 %545
  %v551 = vunpack.c.l.b16 %v540
  %v552 = vunpack.c.l.b16 %v541
  %v553 = vunpack.c.l.b16 %v542
  %v554 = vunpack.c.l.b16 %v543
  %v555 = vpack.c.b16 %v552, %v551
  %v556 = vpack.c.b16 %v554, %v553
  %v560 = vsel %vm42, %v546, 0
  %562 = vmatpush.bf16.msra.mxu0 0
  %563 = vmatpush.bf16.msra.mxu0 0
  %564 = vmatpush.bf16.msra.mxu0 0
  %565 = vmatpush.bf16.msra.mxu0 0
  %566 = vmatpush.bf16.msra.mxu0 0
  %567 = vmatpush.bf16.msra.mxu0 0
  %568 = vmatpush.bf16.msra.mxu0 %v556
  %569 = vmatpush.bf16.msra.mxu0 %v555
  %570 = vmatmul.bf16.gmra.mxu0 %v560
  %v571 = vpop.f32.mrf.mxu0
  %v572 = vadd.f32 0.0, %v571
  %v573 = vpop.f32.mrf.mxu0
  %574 = vdwg.mxu0
  %v575 = vadd.f32 %v538, %v572
  %v576 = vmul.f32 %v575, 0.5
  %v577 = vtanh.pop %v576
  %v578 = vadd.f32 %v577, 1.0
  %v579 = vmul.f32 %v578, 0.5
  %v580 = vtanh.pop %v575
  %v581 = vmul.f32 %v579, %v518
  %583 = vrot.lane.b32.xlu0 %v580, 64
  %v584 = vpop.permute.xlu0 %583
  %v586 = vmul.f32 %v579, %v584
  %588 = vrot.lane.b32.xlu0 %v586, 32
  %v589 = vpop.permute.xlu0 %588
  %v591 = vadd.f32 %v581, %v589
  %v592 = vtanh.pop %v591
  %594 = vrot.lane.b32.xlu0 %v592, 64
  %v595 = vpop.permute.xlu0 %594
  %v597 = vmul.f32 %v579, %v595
  %v599 = vrot.slane %v597, 1
  %v600 = vperm.slane %v597, 0
  %v601 = vperm.slane %v599, 0
  %602 = vrot.lane.b32.xlu0 %v600, 32
  %v603 = vpop.permute.xlu0 %602
  %604 = vrot.lane.b32.xlu0 %v601, 32
  %v605 = vpop.permute.xlu0 %604
  %608 = vst.msk [vmem:[%s2 + $0x7] sm:$0x1] %vm96, %v603
  %609 = vst.msk [vmem:[%s2 + $0xf] sm:$0x1] %vm96, %v605
  %610 = vrot.lane.b32.xlu0 %v597, 32
  %v611 = vpop.permute.xlu0 %610
  %vm613 = vcmask 254976
  %614 = vst.msk [vmem:[#allocation2] sm:$0x3] %vm613, %v611
  %616 = vrot.lane.b32.xlu0 %v591, 96
  %v617 = vpop.permute.xlu0 %616
  %619 = vst.msk [vmem:[#allocation3] sm:$0x3] %vm613, %v617
  // Predicated region
  $region14: #{rnn_forward.8} parent=0 // pred_check
    %p620 = pneg %p15
  $region15: #{rnn_forward.8} parent=0 // pred_check_branch
    %622 = sbr.rel (%p620) target = $region17
  $region16: #{rnn_forward.8} parent=0 // pred_region
    %623 = vst.msk [vmem:[%s3] sm:$0x3] %vm613, %v611
    %624 = vst.msk [vmem:[%s4] sm:$0x3] %vm613, %v617
  $region17: #{rnn_forward.8} parent=0 // pred_fallthru
    _
  // Predicated region
  $region18: #{rnn_forward.8} parent=0 // pred_check
    _
  $region19: #{rnn_forward.8} parent=0 // pred_check_branch
    %626 = sbr.rel (0) target = $region21
  $region20: #{rnn_forward.8} parent=0 // pred_region
    _
  $region21: #{rnn_forward.8} parent=0 // pred_fallthru
    _
  // Predicated region
  $region22: #{rnn_forward.8} parent=0 // pred_check
    _
  $region23: #{rnn_forward.8} parent=0 // pred_check_branch
    %628 = sbr.rel (0) target = $region25
  $region24: #{rnn_forward.8} parent=0 // pred_region
    _
  $region25: #{rnn_forward.8} parent=0 // pred_fallthru
    _
  // Predicated region
  $region26: #{rnn_forward.8} parent=0 // pred_check
    _
  $region27: #{rnn_forward.8} parent=0 // pred_check_branch
    %630 = sbr.rel (0) target = $region29
  $region28: #{rnn_forward.8} parent=0 // pred_region
    _
  $region29: #{rnn_forward.8} parent=0 // pred_fallthru
    _
  // Predicated region
  $region30: #{rnn_forward.8} parent=0 // pred_check
    _
  $region31: #{rnn_forward.8} parent=0 // pred_check_branch
    %632 = sbr.rel (0) target = $region33
  $region32: #{rnn_forward.8} parent=0 // pred_region
    _
  $region33: #{rnn_forward.8} parent=0 // pred_fallthru
    _
  // Predicated region
  $region34: #{rnn_forward.8} parent=0 // pred_check
    _
  $region35: #{rnn_forward.8} parent=0 // pred_check_branch
    %634 = sbr.rel (0) target = $region37
  $region36: #{rnn_forward.8} parent=0 // pred_region
    _
  $region37: #{rnn_forward.8} parent=0 // pred_fallthru
    _
  // Predicated region
  $region38: #{rnn_forward.8} parent=0 // pred_check
    _
  $region39: #{rnn_forward.8} parent=0 // pred_check_branch
    %636 = sbr.rel (0) target = $region41
  $region40: #{rnn_forward.8} parent=0 // pred_region
    _
  $region41: #{rnn_forward.8} parent=0 // pred_fallthru
    _

// kernel: rnn_forward.6
$region0: #{rnn_forward.6}
  #allocation0 [shape = 'u32[]', space=smem, size = 0x4, offset = 0x4, fixed_abs, tag = 'smem constant byte address 0x4 - core index']
  #allocation1 [shape = 'u32[72,128]{1,0:T(1,128)}', space=vmem, size = 0x9000, scoped, tag = 'internal scratch']
  #allocation2 [shape = 'f32[2,32]{1,0:T(2,128)}', space=vmem, size = 0x400, scoped, tag = 'scratch operand']
  #allocation3 [shape = 'f32[2,32]{1,0:T(2,128)}', space=vmem, size = 0x400, scoped, tag = 'scratch operand']
  %s0 = inlined_call_operand.vmem [shape: f32[8,2,128], index: 0, kind: input, shape index: {}]
  %s1 = inlined_call_operand.vmem [shape: bf16[32,128], index: 1, kind: input, shape index: {}]
  %s2 = inlined_call_operand.vmem [shape: f32[8,2,32], index: 2, kind: output, shape index: {0}]
  %s3 = inlined_call_operand.vmem [shape: f32[2,32], index: 3, kind: output, shape index: {1}]
  %s4 = inlined_call_operand.vmem [shape: f32[2,32], index: 4, kind: output, shape index: {2}]
  %5 = xla_tuple %s2, %s3, %s4
  %s6 = sld [smem:[#allocation0]]
  $region42: #{rnn_forward.6} parent=0
    _
  %s8 = ssub.s32 1, %s6
  %s9 = scalar_select 0, %s8, %s6
  // Predicated region
  $region2: #{rnn_forward.6} parent=0 // pred_check
    _
  $region3: #{rnn_forward.6} parent=0 // pred_check_branch
    %11 = sbr.rel (0) target = $region5
  $region4: #{rnn_forward.6} parent=0 // pred_region
    _
  $region5: #{rnn_forward.6} parent=0 // pred_fallthru
    _
  // Predicated region
  $region6: #{rnn_forward.6} parent=0 // pred_check
    _
  $region7: #{rnn_forward.6} parent=0 // pred_check_branch
    %13 = sbr.rel (0) target = $region9
  $region8: #{rnn_forward.6} parent=0 // pred_region
    _
  $region9: #{rnn_forward.6} parent=0 // pred_fallthru
    _
  %p15 = scmp.eq.s32.totalorder 0, 0
  // Predicated region
  $region10: #{rnn_forward.6} parent=0 // pred_check
    %p16 = pneg %p15
  $region11: #{rnn_forward.6} parent=0 // pred_check_branch
    %18 = sbr.rel (%p16) target = $region13
  $region12: #{rnn_forward.6} parent=0 // pred_region
    %vm19 = vcmask 254976
    %20 = vst.msk [vmem:[#allocation2] sm:$0x3] %vm19, 0.0
    %21 = vst.msk [vmem:[#allocation3] sm:$0x3] %vm19, 0.0
  $region13: #{rnn_forward.6} parent=0 // pred_fallthru
    _
  %v22 = vld [vmem:[#allocation2] sm:$0x3]
  %v23 = vld [vmem:[#allocation3] sm:$0x3]
  %v24 = vld [vmem:[%s0] sm:$0x3]
  %v25 = vpack.c.bf16 %v22, %v22
  %v26 = vld [vmem:[%s1] sm:$0xf]
  %v27 = vld [vmem:[%s1 + $0x4] sm:$0xf]
  %v28 = vld [vmem:[%s1 + $0x8] sm:$0xf]
  %v29 = vld [vmem:[%s1 + $0xc] sm:$0xf]
  %v34 = vunpack.c.l.b16 %v26
  %v35 = vunpack.c.l.b16 %v27
  %v36 = vunpack.c.l.b16 %v28
  %v37 = vunpack.c.l.b16 %v29
  %v38 = vpack.c.b16 %v35, %v34
  %v39 = vpack.c.b16 %v37, %v36
  %vm42 = vcmask 261120
  %v44 = vsel %vm42, %v25, 0
  %46 = vmatpush.bf16.msra.mxu0 0
  %47 = vmatpush.bf16.msra.mxu0 0
  %48 = vmatpush.bf16.msra.mxu0 0
  %49 = vmatpush.bf16.msra.mxu0 0
  %50 = vmatpush.bf16.msra.mxu0 0
  %51 = vmatpush.bf16.msra.mxu0 0
  %52 = vmatpush.bf16.msra.mxu0 %v39
  %53 = vmatpush.bf16.msra.mxu0 %v38
  %54 = vmatmul.bf16.gmra.mxu0 %v44
  %v55 = vpop.f32.mrf.mxu0
  %v56 = vadd.f32 0.0, %v55
  %v57 = vpop.f32.mrf.mxu0
  %58 = vdwg.mxu0
  %v59 = vadd.f32 %v24, %v56
  %v60 = vmul.f32 %v59, 0.5
  %v61 = vtanh.pop %v60
  %v62 = vadd.f32 %v61, 1.0
  %v63 = vmul.f32 %v62, 0.5
  %v64 = vtanh.pop %v59
  %66 = vrot.lane.b32.xlu0 %v23, 32
  %v67 = vpop.permute.xlu0 %66
  %v69 = vmul.f32 %v63, %v67
  %71 = vrot.lane.b32.xlu0 %v64, 64
  %v72 = vpop.permute.xlu0 %71
  %v74 = vmul.f32 %v63, %v72
  %76 = vrot.lane.b32.xlu0 %v74, 32
  %v77 = vpop.permute.xlu0 %76
  %v79 = vadd.f32 %v69, %v77
  %v80 = vtanh.pop %v79
  %82 = vrot.lane.b32.xlu0 %v80, 64
  %v83 = vpop.permute.xlu0 %82
  %v85 = vmul.f32 %v63, %v83
  %87 = vrot.lane.b32.xlu0 %v85, 32
  %v88 = vpop.permute.xlu0 %87
  %vm90 = vcmask 254976
  %91 = vst.msk [vmem:[%s2] sm:$0x3] %vm90, %v88
  %s92 = scalar_lea.vmem %s0, 2
  %v93 = vld [vmem:[%s92] sm:$0x3]
  %v94 = vpack.c.bf16 %v85, %v85
  %v95 = vld [vmem:[%s1] sm:$0xf]
  %v96 = vld [vmem:[%s1 + $0x4] sm:$0xf]
  %v97 = vld [vmem:[%s1 + $0x8] sm:$0xf]
  %v98 = vld [vmem:[%s1 + $0xc] sm:$0xf]
  %100 = vrot.lane.b32.xlu0 %v94, 32
  %v101 = vpop.permute.xlu0 %100
  %v106 = vunpack.c.l.b16 %v95
  %v107 = vunpack.c.l.b16 %v96
  %v108 = vunpack.c.l.b16 %v97
  %v109 = vunpack.c.l.b16 %v98
  %v110 = vpack.c.b16 %v107, %v106
  %v111 = vpack.c.b16 %v109, %v108
  %v115 = vsel %vm42, %v101, 0
  %117 = vmatpush.bf16.msra.mxu0 0
  %118 = vmatpush.bf16.msra.mxu0 0
  %119 = vmatpush.bf16.msra.mxu0 0
  %120 = vmatpush.bf16.msra.mxu0 0
  %121 = vmatpush.bf16.msra.mxu0 0
  %122 = vmatpush.bf16.msra.mxu0 0
  %123 = vmatpush.bf16.msra.mxu0 %v111
  %124 = vmatpush.bf16.msra.mxu0 %v110
  %125 = vmatmul.bf16.gmra.mxu0 %v115
  %v126 = vpop.f32.mrf.mxu0
  %v127 = vadd.f32 0.0, %v126
  %v128 = vpop.f32.mrf.mxu0
  %129 = vdwg.mxu0
  %v130 = vadd.f32 %v93, %v127
  %v131 = vmul.f32 %v130, 0.5
  %v132 = vtanh.pop %v131
  %v133 = vadd.f32 %v132, 1.0
  %v134 = vmul.f32 %v133, 0.5
  %v135 = vtanh.pop %v130
  %v136 = vmul.f32 %v134, %v79
  %138 = vrot.lane.b32.xlu0 %v135, 64
  %v139 = vpop.permute.xlu0 %138
  %v141 = vmul.f32 %v134, %v139
  %143 = vrot.lane.b32.xlu0 %v141, 32
  %v144 = vpop.permute.xlu0 %143
  %v146 = vadd.f32 %v136, %v144
  %v147 = vtanh.pop %v146
  %149 = vrot.lane.b32.xlu0 %v147, 64
  %v150 = vpop.permute.xlu0 %149
  %v152 = vmul.f32 %v134, %v150
  %154 = vrot.lane.b32.xlu0 %v152, 32
  %v155 = vpop.permute.xlu0 %154
  %s157 = scalar_lea.vmem %s2, 2
  %158 = vst.msk [vmem:[%s157] sm:$0x3] %vm90, %v155
  %s159 = scalar_lea.vmem %s0, 4
  %v160 = vld [vmem:[%s159] sm:$0x3]
  %v161 = vpack.c.bf16 %v152, %v152
  %v162 = vld [vmem:[%s1] sm:$0xf]
  %v163 = vld [vmem:[%s1 + $0x4] sm:$0xf]
  %v164 = vld [vmem:[%s1 + $0x8] sm:$0xf]
  %v165 = vld [vmem:[%s1 + $0xc] sm:$0xf]
  %167 = vrot.lane.b32.xlu0 %v161, 32
  %v168 = vpop.permute.xlu0 %167
  %v173 = vunpack.c.l.b16 %v162
  %v174 = vunpack.c.l.b16 %v163
  %v175 = vunpack.c.l.b16 %v164
  %v176 = vunpack.c.l.b16 %v165
  %v177 = vpack.c.b16 %v174, %v173
  %v178 = vpack.c.b16 %v176, %v175
  %v182 = vsel %vm42, %v168, 0
  %184 = vmatpush.bf16.msra.mxu0 0
  %185 = vmatpush.bf16.msra.mxu0 0
  %186 = vmatpush.bf16.msra.mxu0 0
  %187 = vmatpush.bf16.msra.mxu0 0
  %188 = vmatpush.bf16.msra.mxu0 0
  %189 = vmatpush.bf16.msra.mxu0 0
  %190 = vmatpush.bf16.msra.mxu0 %v178
  %191 = vmatpush.bf16.msra.mxu0 %v177
  %192 = vmatmul.bf16.gmra.mxu0 %v182
  %v193 = vpop.f32.mrf.mxu0
  %v194 = vadd.f32 0.0, %v193
  %v195 = vpop.f32.mrf.mxu0
  %196 = vdwg.mxu0
  %v197 = vadd.f32 %v160, %v194
  %v198 = vmul.f32 %v197, 0.5
  %v199 = vtanh.pop %v198
  %v200 = vadd.f32 %v199, 1.0
  %v201 = vmul.f32 %v200, 0.5
  %v202 = vtanh.pop %v197
  %v203 = vmul.f32 %v201, %v146
  %205 = vrot.lane.b32.xlu0 %v202, 64
  %v206 = vpop.permute.xlu0 %205
  %v208 = vmul.f32 %v201, %v206
  %210 = vrot.lane.b32.xlu0 %v208, 32
  %v211 = vpop.permute.xlu0 %210
  %v213 = vadd.f32 %v203, %v211
  %v214 = vtanh.pop %v213
  %216 = vrot.lane.b32.xlu0 %v214, 64
  %v217 = vpop.permute.xlu0 %216
  %v219 = vmul.f32 %v201, %v217
  %221 = vrot.lane.b32.xlu0 %v219, 32
  %v222 = vpop.permute.xlu0 %221
  %s224 = scalar_lea.vmem %s2, 4
  %225 = vst.msk [vmem:[%s224] sm:$0x3] %vm90, %v222
  %s226 = scalar_lea.vmem %s0, 6
  %v227 = vld [vmem:[%s226] sm:$0x3]
  %v228 = vpack.c.bf16 %v219, %v219
  %v229 = vld [vmem:[%s1] sm:$0xf]
  %v230 = vld [vmem:[%s1 + $0x4] sm:$0xf]
  %v231 = vld [vmem:[%s1 + $0x8] sm:$0xf]
  %v232 = vld [vmem:[%s1 + $0xc] sm:$0xf]
  %234 = vrot.lane.b32.xlu0 %v228, 32
  %v235 = vpop.permute.xlu0 %234
  %v240 = vunpack.c.l.b16 %v229
  %v241 = vunpack.c.l.b16 %v230
  %v242 = vunpack.c.l.b16 %v231
  %v243 = vunpack.c.l.b16 %v232
  %v244 = vpack.c.b16 %v241, %v240
  %v245 = vpack.c.b16 %v243, %v242
  %v249 = vsel %vm42, %v235, 0
  %251 = vmatpush.bf16.msra.mxu0 0
  %252 = vmatpush.bf16.msra.mxu0 0
  %253 = vmatpush.bf16.msra.mxu0 0
  %254 = vmatpush.bf16.msra.mxu0 0
  %255 = vmatpush.bf16.msra.mxu0 0
  %256 = vmatpush.bf16.msra.mxu0 0
  %257 = vmatpush.bf16.msra.mxu0 %v245
  %258 = vmatpush.bf16.msra.mxu0 %v244
  %259 = vmatmul.bf16.gmra.mxu0 %v249
  %v260 = vpop.f32.mrf.mxu0
  %v261 = vadd.f32 0.0, %v260
  %v262 = vpop.f32.mrf.mxu0
  %263 = vdwg.mxu0
  %v264 = vadd.f32 %v227, %v261
  %v265 = vmul.f32 %v264, 0.5
  %v266 = vtanh.pop %v265
  %v267 = vadd.f32 %v266, 1.0
  %v268 = vmul.f32 %v267, 0.5
  %v269 = vtanh.pop %v264
  %v270 = vmul.f32 %v268, %v213
  %272 = vrot.lane.b32.xlu0 %v269, 64
  %v273 = vpop.permute.xlu0 %272
  %v275 = vmul.f32 %v268, %v273
  %277 = vrot.lane.b32.xlu0 %v275, 32
  %v278 = vpop.permute.xlu0 %277
  %v280 = vadd.f32 %v270, %v278
  %v281 = vtanh.pop %v280
  %283 = vrot.lane.b32.xlu0 %v281, 64
  %v284 = vpop.permute.xlu0 %283
  %v286 = vmul.f32 %v268, %v284
  %288 = vrot.lane.b32.xlu0 %v286, 32
  %v289 = vpop.permute.xlu0 %288
  %s291 = scalar_lea.vmem %s2, 6
  %292 = vst.msk [vmem:[%s291] sm:$0x3] %vm90, %v289
  %s293 = scalar_lea.vmem %s0, 8
  %v294 = vld [vmem:[%s293] sm:$0x3]
  %v295 = vpack.c.bf16 %v286, %v286
  %v296 = vld [vmem:[%s1] sm:$0xf]
  %v297 = vld [vmem:[%s1 + $0x4] sm:$0xf]
  %v298 = vld [vmem:[%s1 + $0x8] sm:$0xf]
  %v299 = vld [vmem:[%s1 + $0xc] sm:$0xf]
  %301 = vrot.lane.b32.xlu0 %v295, 32
  %v302 = vpop.permute.xlu0 %301
  %v307 = vunpack.c.l.b16 %v296
  %v308 = vunpack.c.l.b16 %v297
  %v309 = vunpack.c.l.b16 %v298
  %v310 = vunpack.c.l.b16 %v299
  %v311 = vpack.c.b16 %v308, %v307
  %v312 = vpack.c.b16 %v310, %v309
  %v316 = vsel %vm42, %v302, 0
  %318 = vmatpush.bf16.msra.mxu0 0
  %319 = vmatpush.bf16.msra.mxu0 0
  %320 = vmatpush.bf16.msra.mxu0 0
  %321 = vmatpush.bf16.msra.mxu0 0
  %322 = vmatpush.bf16.msra.mxu0 0
  %323 = vmatpush.bf16.msra.mxu0 0
  %324 = vmatpush.bf16.msra.mxu0 %v312
  %325 = vmatpush.bf16.msra.mxu0 %v311
  %326 = vmatmul.bf16.gmra.mxu0 %v316
  %v327 = vpop.f32.mrf.mxu0
  %v328 = vadd.f32 0.0, %v327
  %v329 = vpop.f32.mrf.mxu0
  %330 = vdwg.mxu0
  %v331 = vadd.f32 %v294, %v328
  %v332 = vmul.f32 %v331, 0.5
  %v333 = vtanh.pop %v332
  %v334 = vadd.f32 %v333, 1.0
  %v335 = vmul.f32 %v334, 0.5
  %v336 = vtanh.pop %v331
  %v337 = vmul.f32 %v335, %v280
  %339 = vrot.lane.b32.xlu0 %v336, 64
  %v340 = vpop.permute.xlu0 %339
  %v342 = vmul.f32 %v335, %v340
  %344 = vrot.lane.b32.xlu0 %v342, 32
  %v345 = vpop.permute.xlu0 %344
  %v347 = vadd.f32 %v337, %v345
  %v348 = vtanh.pop %v347
  %350 = vrot.lane.b32.xlu0 %v348, 64
  %v351 = vpop.permute.xlu0 %350
  %v353 = vmul.f32 %v335, %v351
  %355 = vrot.lane.b32.xlu0 %v353, 32
  %v356 = vpop.permute.xlu0 %355
  %s358 = scalar_lea.vmem %s2, 8
  %359 = vst.msk [vmem:[%s358] sm:$0x3] %vm90, %v356
  %s360 = scalar_lea.vmem %s0, 10
  %v361 = vld [vmem:[%s360] sm:$0x3]
  %v362 = vpack.c.bf16 %v353, %v353
  %v363 = vld [vmem:[%s1] sm:$0xf]
  %v364 = vld [vmem:[%s1 + $0x4] sm:$0xf]
  %v365 = vld [vmem:[%s1 + $0x8] sm:$0xf]
  %v366 = vld [vmem:[%s1 + $0xc] sm:$0xf]
  %368 = vrot.lane.b32.xlu0 %v362, 32
  %v369 = vpop.permute.xlu0 %368
  %v374 = vunpack.c.l.b16 %v363
  %v375 = vunpack.c.l.b16 %v364
  %v376 = vunpack.c.l.b16 %v365
  %v377 = vunpack.c.l.b16 %v366
  %v378 = vpack.c.b16 %v375, %v374
  %v379 = vpack.c.b16 %v377, %v376
  %v383 = vsel %vm42, %v369, 0
  %385 = vmatpush.bf16.msra.mxu0 0
  %386 = vmatpush.bf16.msra.mxu0 0
  %387 = vmatpush.bf16.msra.mxu0 0
  %388 = vmatpush.bf16.msra.mxu0 0
  %389 = vmatpush.bf16.msra.mxu0 0
  %390 = vmatpush.bf16.msra.mxu0 0
  %391 = vmatpush.bf16.msra.mxu0 %v379
  %392 = vmatpush.bf16.msra.mxu0 %v378
  %393 = vmatmul.bf16.gmra.mxu0 %v383
  %v394 = vpop.f32.mrf.mxu0
  %v395 = vadd.f32 0.0, %v394
  %v396 = vpop.f32.mrf.mxu0
  %397 = vdwg.mxu0
  %v398 = vadd.f32 %v361, %v395
  %v399 = vmul.f32 %v398, 0.5
  %v400 = vtanh.pop %v399
  %v401 = vadd.f32 %v400, 1.0
  %v402 = vmul.f32 %v401, 0.5
  %v403 = vtanh.pop %v398
  %v404 = vmul.f32 %v402, %v347
  %406 = vrot.lane.b32.xlu0 %v403, 64
  %v407 = vpop.permute.xlu0 %406
  %v409 = vmul.f32 %v402, %v407
  %411 = vrot.lane.b32.xlu0 %v409, 32
  %v412 = vpop.permute.xlu0 %411
  %v414 = vadd.f32 %v404, %v412
  %v415 = vtanh.pop %v414
  %417 = vrot.lane.b32.xlu0 %v415, 64
  %v418 = vpop.permute.xlu0 %417
  %v420 = vmul.f32 %v402, %v418
  %422 = vrot.lane.b32.xlu0 %v420, 32
  %v423 = vpop.permute.xlu0 %422
  %s425 = scalar_lea.vmem %s2, 10
  %426 = vst.msk [vmem:[%s425] sm:$0x3] %vm90, %v423
  %s427 = scalar_lea.vmem %s0, 12
  %v428 = vld [vmem:[%s427] sm:$0x3]
  %v429 = vpack.c.bf16 %v420, %v420
  %v430 = vld [vmem:[%s1] sm:$0xf]
  %v431 = vld [vmem:[%s1 + $0x4] sm:$0xf]
  %v432 = vld [vmem:[%s1 + $0x8] sm:$0xf]
  %v433 = vld [vmem:[%s1 + $0xc] sm:$0xf]
  %435 = vrot.lane.b32.xlu0 %v429, 32
  %v436 = vpop.permute.xlu0 %435
  %v441 = vunpack.c.l.b16 %v430
  %v442 = vunpack.c.l.b16 %v431
  %v443 = vunpack.c.l.b16 %v432
  %v444 = vunpack.c.l.b16 %v433
  %v445 = vpack.c.b16 %v442, %v441
  %v446 = vpack.c.b16 %v444, %v443
  %v450 = vsel %vm42, %v436, 0
  %452 = vmatpush.bf16.msra.mxu0 0
  %453 = vmatpush.bf16.msra.mxu0 0
  %454 = vmatpush.bf16.msra.mxu0 0
  %455 = vmatpush.bf16.msra.mxu0 0
  %456 = vmatpush.bf16.msra.mxu0 0
  %457 = vmatpush.bf16.msra.mxu0 0
  %458 = vmatpush.bf16.msra.mxu0 %v446
  %459 = vmatpush.bf16.msra.mxu0 %v445
  %460 = vmatmul.bf16.gmra.mxu0 %v450
  %v461 = vpop.f32.mrf.mxu0
  %v462 = vadd.f32 0.0, %v461
  %v463 = vpop.f32.mrf.mxu0
  %464 = vdwg.mxu0
  %v465 = vadd.f32 %v428, %v462
  %v466 = vmul.f32 %v465, 0.5
  %v467 = vtanh.pop %v466
  %v468 = vadd.f32 %v467, 1.0
  %v469 = vmul.f32 %v468, 0.5
  %v470 = vtanh.pop %v465
  %v471 = vmul.f32 %v469, %v414
  %473 = vrot.lane.b32.xlu0 %v470, 64
  %v474 = vpop.permute.xlu0 %473
  %v476 = vmul.f32 %v469, %v474
  %478 = vrot.lane.b32.xlu0 %v476, 32
  %v479 = vpop.permute.xlu0 %478
  %v481 = vadd.f32 %v471, %v479
  %v482 = vtanh.pop %v481
  %484 = vrot.lane.b32.xlu0 %v482, 64
  %v485 = vpop.permute.xlu0 %484
  %v487 = vmul.f32 %v469, %v485
  %489 = vrot.lane.b32.xlu0 %v487, 32
  %v490 = vpop.permute.xlu0 %489
  %s492 = scalar_lea.vmem %s2, 12
  %493 = vst.msk [vmem:[%s492] sm:$0x3] %vm90, %v490
  %s494 = scalar_lea.vmem %s0, 14
  %v495 = vld [vmem:[%s494] sm:$0x3]
  %v496 = vpack.c.bf16 %v487, %v487
  %v497 = vld [vmem:[%s1] sm:$0xf]
  %v498 = vld [vmem:[%s1 + $0x4] sm:$0xf]
  %v499 = vld [vmem:[%s1 + $0x8] sm:$0xf]
  %v500 = vld [vmem:[%s1 + $0xc] sm:$0xf]
  %502 = vrot.lane.b32.xlu0 %v496, 32
  %v503 = vpop.permute.xlu0 %502
  %v508 = vunpack.c.l.b16 %v497
  %v509 = vunpack.c.l.b16 %v498
  %v510 = vunpack.c.l.b16 %v499
  %v511 = vunpack.c.l.b16 %v500
  %v512 = vpack.c.b16 %v509, %v508
  %v513 = vpack.c.b16 %v511, %v510
  %v517 = vsel %vm42, %v503, 0
  %519 = vmatpush.bf16.msra.mxu0 0
  %520 = vmatpush.bf16.msra.mxu0 0
  %521 = vmatpush.bf16.msra.mxu0 0
  %522 = vmatpush.bf16.msra.mxu0 0
  %523 = vmatpush.bf16.msra.mxu0 0
  %524 = vmatpush.bf16.msra.mxu0 0
  %525 = vmatpush.bf16.msra.mxu0 %v513
  %526 = vmatpush.bf16.msra.mxu0 %v512
  %527 = vmatmul.bf16.gmra.mxu0 %v517
  %v528 = vpop.f32.mrf.mxu0
  %v529 = vadd.f32 0.0, %v528
  %v530 = vpop.f32.mrf.mxu0
  %531 = vdwg.mxu0
  %v532 = vadd.f32 %v495, %v529
  %v533 = vmul.f32 %v532, 0.5
  %v534 = vtanh.pop %v533
  %v535 = vadd.f32 %v534, 1.0
  %v536 = vmul.f32 %v535, 0.5
  %v537 = vtanh.pop %v532
  %v538 = vmul.f32 %v536, %v481
  %540 = vrot.lane.b32.xlu0 %v537, 64
  %v541 = vpop.permute.xlu0 %540
  %v543 = vmul.f32 %v536, %v541
  %545 = vrot.lane.b32.xlu0 %v543, 32
  %v546 = vpop.permute.xlu0 %545
  %v548 = vadd.f32 %v538, %v546
  %v549 = vtanh.pop %v548
  %551 = vrot.lane.b32.xlu0 %v549, 64
  %v552 = vpop.permute.xlu0 %551
  %v554 = vmul.f32 %v536, %v552
  %556 = vrot.lane.b32.xlu0 %v554, 32
  %v557 = vpop.permute.xlu0 %556
  %s559 = scalar_lea.vmem %s2, 14
  %560 = vst.msk [vmem:[%s559] sm:$0x3] %vm90, %v557
  %561 = vst.msk [vmem:[#allocation2] sm:$0x3] %vm90, %v557
  %563 = vrot.lane.b32.xlu0 %v548, 96
  %v564 = vpop.permute.xlu0 %563
  %566 = vst.msk [vmem:[#allocation3] sm:$0x3] %vm90, %v564
  // Predicated region
  $region14: #{rnn_forward.6} parent=0 // pred_check
    %p567 = pneg %p15
  $region15: #{rnn_forward.6} parent=0 // pred_check_branch
    %569 = sbr.rel (%p567) target = $region17
  $region16: #{rnn_forward.6} parent=0 // pred_region
    %570 = vst.msk [vmem:[%s3] sm:$0x3] %vm90, %v557
    %571 = vst.msk [vmem:[%s4] sm:$0x3] %vm90, %v564
  $region17: #{rnn_forward.6} parent=0 // pred_fallthru
    _
  // Predicated region
  $region18: #{rnn_forward.6} parent=0 // pred_check
    _
  $region19: #{rnn_forward.6} parent=0 // pred_check_branch
    %573 = sbr.rel (0) target = $region21
  $region20: #{rnn_forward.6} parent=0 // pred_region
    _
  $region21: #{rnn_forward.6} parent=0 // pred_fallthru
    _
  // Predicated region
  $region22: #{rnn_forward.6} parent=0 // pred_check
    _
  $region23: #{rnn_forward.6} parent=0 // pred_check_branch
    %575 = sbr.rel (0) target = $region25
  $region24: #{rnn_forward.6} parent=0 // pred_region
    _
  $region25: #{rnn_forward.6} parent=0 // pred_fallthru
    _
  // Predicated region
  $region26: #{rnn_forward.6} parent=0 // pred_check
    _
  $region27: #{rnn_forward.6} parent=0 // pred_check_branch
    %577 = sbr.rel (0) target = $region29
  $region28: #{rnn_forward.6} parent=0 // pred_region
    _
  $region29: #{rnn_forward.6} parent=0 // pred_fallthru
    _
  // Predicated region
  $region30: #{rnn_forward.6} parent=0 // pred_check
    _
  $region31: #{rnn_forward.6} parent=0 // pred_check_branch
    %579 = sbr.rel (0) target = $region33
  $region32: #{rnn_forward.6} parent=0 // pred_region
    _
  $region33: #{rnn_forward.6} parent=0 // pred_fallthru
    _
  // Predicated region
  $region34: #{rnn_forward.6} parent=0 // pred_check
    _
  $region35: #{rnn_forward.6} parent=0 // pred_check_branch
    %581 = sbr.rel (0) target = $region37
  $region36: #{rnn_forward.6} parent=0 // pred_region
    _
  $region37: #{rnn_forward.6} parent=0 // pred_fallthru
    _
  // Predicated region
  $region38: #{rnn_forward.6} parent=0 // pred_check
    _
  $region39: #{rnn_forward.6} parent=0 // pred_check_branch
    %583 = sbr.rel (0) target = $region41
  $region40: #{rnn_forward.6} parent=0 // pred_region
    _
  $region41: #{rnn_forward.6} parent=0 // pred_fallthru
    _

// kernel: rnn_forward.9
$region0: #{rnn_forward.9}
  #allocation0 [shape = 'u32[]', space=smem, size = 0x4, offset = 0x4, fixed_abs, tag = 'smem constant byte address 0x4 - core index']
  #allocation1 [shape = 'u32[72,128]{1,0:T(1,128)}', space=vmem, size = 0x9000, scoped, tag = 'internal scratch']
  %s0 = inlined_call_operand.vmem [shape: bf16[16,32], index: 0, kind: input, shape index: {}]
  %s1 = inlined_call_operand.vmem [shape: bf16[32,128], index: 1, kind: input, shape index: {}]
  %s2 = inlined_call_operand.vmem [shape: f32[1,128], index: 2, kind: input, shape index: {}]
  %s3 = inlined_call_operand.hbm [shape: f32[16,128], index: 3, kind: output, shape index: {}]
  %s4 = sld [smem:[#allocation0]]
  $region22: #{rnn_forward.9} parent=0
    _
  %s6 = ssub.s32 1, %s4
  %s7 = scalar_select 0, %s6, %s4
  $region1: #{rnn_forward.9} parent=0
    #allocation2 [shape = 'u8[8192]{0}', space=vmem, size = 0x2000, scoped, tag = 'output window, operand 0, single buffered']
    #allocation3 [shape = 's32[1]{0}', space=sflag, size = 0x4, scoped, tag = 'scoped memory for rnn_forward.9']
    %8 = vsyncpa [#allocation3], 0
    // Predicated region
    $region2: #{rnn_forward.9} parent=1 // pred_check
      _
    $region3: #{rnn_forward.9} parent=1 // pred_check_branch
      %10 = sbr.rel (0) target = $region5
    $region4: #{rnn_forward.9} parent=1 // pred_region
      _
    $region5: #{rnn_forward.9} parent=1 // pred_fallthru
      _
    // Predicated region
    $region6: #{rnn_forward.9} parent=1 // pred_check
      _
    $region7: #{rnn_forward.9} parent=1 // pred_check_branch
      %12 = sbr.rel (0) target = $region9
    $region8: #{rnn_forward.9} parent=1 // pred_region
      _
    $region9: #{rnn_forward.9} parent=1 // pred_fallthru
      _
    // Predicated region
    $region10: #{rnn_forward.9} parent=1 // pred_check
      _
    $region11: #{rnn_forward.9} parent=1 // pred_check_branch
      %14 = sbr.rel (0) target = $region13
    $region12: #{rnn_forward.9} parent=1 // pred_region
      _
    $region13: #{rnn_forward.9} parent=1 // pred_fallthru
      _
    %v16 = vld [vmem:[%s0] sm:$0xf]
    %v17 = vld [vmem:[%s0 + $0x4] sm:$0xf]
    %v18 = vld [vmem:[%s1] sm:$0xf]
    %v19 = vld [vmem:[%s1 + $0x4] sm:$0xf]
    %v20 = vld [vmem:[%s1 + $0x8] sm:$0xf]
    %v21 = vld [vmem:[%s1 + $0xc] sm:$0xf]
    %v22 = vld [vmem:[%s2] sm:$0x1]
    %v24 = vperm.slane %v22, 0
    %v28 = vunpack.c.l.b16 %v16
    %v29 = vunpack.c.l.b16 %v17
    %v30 = vpack.c.b16 %v29, %v28
    %v35 = vunpack.c.l.b16 %v18
    %v36 = vunpack.c.l.b16 %v19
    %v37 = vunpack.c.l.b16 %v20
    %v38 = vunpack.c.l.b16 %v21
    %v39 = vpack.c.b16 %v36, %v35
    %v40 = vpack.c.b16 %v38, %v37
    %vm43 = vcmask 261120
    %v45 = vsel %vm43, %v30, 0
    %47 = vmatpush.bf16.msra.mxu0 0
    %48 = vmatpush.bf16.msra.mxu0 0
    %49 = vmatpush.bf16.msra.mxu0 0
    %50 = vmatpush.bf16.msra.mxu0 0
    %51 = vmatpush.bf16.msra.mxu0 0
    %52 = vmatpush.bf16.msra.mxu0 0
    %53 = vmatpush.bf16.msra.mxu0 %v40
    %54 = vmatpush.bf16.msra.mxu0 %v39
    %55 = vmatmul.bf16.gmra.mxu0 %v45
    %v56 = vpop.f32.mrf.mxu0
    %v57 = vadd.f32 %v24, %v56
    %v58 = vpop.f32.mrf.mxu0
    %v59 = vadd.f32 %v24, %v58
    %60 = vdwg.mxu0
    %61 = vst [vmem:[#allocation2] sm:$0xff] %v57
    %62 = vst [vmem:[#allocation2 + $0x8] sm:$0xff] %v59
    // Predicated region
    $region14: #{rnn_forward.9} parent=1 // pred_check
      _
    $region15: #{rnn_forward.9} parent=1 // pred_check_branch
      %64 = sbr.rel (0) target = $region17
    $region16: #{rnn_forward.9} parent=1 // pred_region
      %66 = vsyncadd [#allocation3], 0
      %s67 = sshll.u32 [#allocation2], 4
      %s68 = int_to_ptr.vmem [resolvable:$true] %s67
      %s69 = sshll.u32 %s3, 4
      %s70 = int_to_ptr.hbm [resolvable:$true] %s69
      %75 = dma.vmem_to_hbm [thread:$0]  %s68, 256, %s70, [#allocation3], 128, 128, 8
    $region17: #{rnn_forward.9} parent=1 // pred_fallthru
      _
    // Predicated region
    $region18: #{rnn_forward.9} parent=1 // pred_check
      _
    $region19: #{rnn_forward.9} parent=1 // pred_check_branch
      %77 = sbr.rel (0) target = $region21
    $region20: #{rnn_forward.9} parent=1 // pred_region
      %79 = dma.done [#allocation3], 256
    $region21: #{rnn_forward.9} parent=1 // pred_fallthru
      _
    %80 = vsyncpa [#allocation3], 1

</llo_original>
